<compile_context>
chip_gen: v7x
topology: tpu7x:2x2x1
jax: 0.10.0
libtpu: 0.0.40
codegen_flags: <defaults>
</compile_context>

<pallas_src>
import functools

import jax
import jax.numpy as jnp
import numpy as np
from jax.experimental import pallas as pl
from jax.experimental.pallas import tpu as pltpu

ALIGN = 8  # fixed, sublane-aligned interior offset inside the padded scratch


def _relu6(v):
    return jnp.minimum(jnp.maximum(v, 0.0), 6.0)


# -----------------------------------------------------------------------------
# Pallas kernel: one InvertedResidual forward for one batch element.
# Grid = (N,).  All weights are small and fully resident in VMEM.
# -----------------------------------------------------------------------------
def inverted_residual_kernel(x_ref,
                             w1_ref, b1_ref,     # expand 1x1 (BN scale folded), shift
                             wdw_ref, bdw_ref,   # depthwise 3x3 taps (BN folded), shift
                             w3_ref, b3_ref,     # project 1x1 (BN scale folded), shift
                             out_ref, padbuf,
                             *, dilation, has_expand, use_res):
    H = x_ref.shape[1]
    W = x_ref.shape[2]
    Cin = x_ref.shape[3]
    hidden = wdw_ref.shape[1]
    Cout = out_ref.shape[3]
    d = dilation

    x = x_ref[0].astype(jnp.float32)          # (H, W, Cin)
    xf = x.reshape(H * W, Cin)                 # (H*W, Cin)

    # ---- expand 1x1 conv + folded BN + ReLU6 (bf16 MXU, f32 accumulate) ----
    if has_expand:
        h = jnp.dot(xf.astype(jnp.bfloat16), w1_ref[...],
                    preferred_element_type=jnp.float32) + b1_ref[...]
        h = _relu6(h)
    else:
        h = xf                                  # TODO(synk): expand_ratio == 1 path untested
    h = h.reshape(H, W, hidden)

    # ---- depthwise 3x3 (dilation d, stride 1) + folded BN + ReLU6 ----------
    # Zero only the d-wide halo ring the taps read; interior is overwritten
    # each step at a fixed, sublane-aligned offset.
    zrow = jnp.zeros((d, W + 2 * d, hidden), jnp.float32)
    zcol = jnp.zeros((H, d, hidden), jnp.float32)
    padbuf[ALIGN - d:ALIGN, ALIGN - d:ALIGN + W + d, :] = zrow
    padbuf[ALIGN + H:ALIGN + H + d, ALIGN - d:ALIGN + W + d, :] = zrow
    padbuf[ALIGN:ALIGN + H, ALIGN - d:ALIGN, :] = zcol
    padbuf[ALIGN:ALIGN + H, ALIGN + W:ALIGN + W + d, :] = zcol
    padbuf[ALIGN:ALIGN + H, ALIGN:ALIGN + W, :] = h   # aligned interior store

    wdw_all = wdw_ref[...]                      # (9, hidden), BN scale already folded
    acc = jnp.zeros((H, W, hidden), jnp.float32)
    for kh in range(3):
        for kw in range(3):
            r0 = ALIGN + (kh - 1) * d
            c0 = ALIGN + (kw - 1) * d
            win = padbuf[r0:r0 + H, c0:c0 + W, :]
            wk = wdw_all[kh * 3 + kw].reshape(1, 1, hidden)
            acc = acc + win * wk

    y = acc.reshape(H * W, hidden)
    y = _relu6(y + bdw_ref[...])

    # ---- project 1x1 conv + folded BN (bf16 MXU, f32 accumulate) -----------
    out = jnp.dot(y.astype(jnp.bfloat16), w3_ref[...],
                  preferred_element_type=jnp.float32) + b3_ref[...]
    if use_res:
        out = out + xf

    out_ref[...] = out.reshape(1, H, W, Cout).astype(out_ref.dtype)


# -----------------------------------------------------------------------------
# Wrapper
# -----------------------------------------------------------------------------
def inverted_residual_apply(x, packed_params, *, stride, dilation,
                            has_expand, use_res):
    assert stride == 1, "TODO(synk): stride=2 not implemented"
    assert has_expand, "TODO(synk): expand_ratio==1 not implemented"
    assert dilation <= ALIGN

    w1, b1, wdw, bdw, w3, b3 = packed_params
    N, H, W, Cin = x.shape
    hidden = wdw.shape[1]
    Cout = w3.shape[1]
    if use_res:
        assert Cin == Cout

    kern = functools.partial(inverted_residual_kernel,
                             dilation=dilation,
                             has_expand=has_expand,
                             use_res=use_res)

    in_specs = [pl.BlockSpec((1, H, W, Cin), lambda n: (n, 0, 0, 0))]
    for p in packed_params:
        in_specs.append(pl.BlockSpec(p.shape, lambda n, _nd=p.ndim: (0,) * _nd))

    return pl.pallas_call(
        kern,
        out_shape=jax.ShapeDtypeStruct((N, H, W, Cout), jnp.float32),
        grid_spec=pltpu.PrefetchScalarGridSpec(
            num_scalar_prefetch=0,
            grid=(N,),
            in_specs=in_specs,
            out_specs=pl.BlockSpec((1, H, W, Cout), lambda n: (n, 0, 0, 0)),
            scratch_shapes=[
                pltpu.VMEM((H + 2 * ALIGN, W + 2 * ALIGN, hidden), jnp.float32)
            ],
        ),
        compiler_params=pltpu.CompilerParams(
            dimension_semantics=("parallel",)),
    )(x, *packed_params)


# -----------------------------------------------------------------------------
# Deterministic synthetic parameters.
#   raw    : conv weights + per-channel BN scale/shift (used by the reference)
#   packed : BN scale folded into conv weights, bf16 MXU weights (kernel input)
# -----------------------------------------------------------------------------
def make_inverted_residual_params(key, inp, oup, expand_ratio):
    hidden = int(round(inp * expand_ratio))
    ks = iter(jax.random.split(key, 16))

    def scale_shift(c):
        s = 1.0 + 0.1 * jax.random.normal(next(ks), (c,), jnp.float32)
        t = 0.1 * jax.random.normal(next(ks), (c,), jnp.float32)
        return s, t

    w1_raw = jax.random.normal(next(ks), (inp, hidden), jnp.float32) / np.sqrt(inp)
    s1, t1 = scale_shift(hidden)
    wdw_raw = jax.random.normal(next(ks), (3, 3, hidden), jnp.float32) * 0.2
    s2, t2 = scale_shift(hidden)
    w3_raw = jax.random.normal(next(ks), (hidden, oup), jnp.float32) / np.sqrt(hidden)
    s3, t3 = scale_shift(oup)

    raw = (w1_raw, s1, t1, wdw_raw, s2, t2, w3_raw, s3, t3)

    w1 = (w1_raw * s1[None, :]).astype(jnp.bfloat16)
    b1 = t1.reshape(1, hidden)
    wdw = (wdw_raw.reshape(9, hidden) * s2[None, :]).astype(jnp.float32)
    bdw = t2.reshape(1, hidden)
    w3 = (w3_raw * s3[None, :]).astype(jnp.bfloat16)
    b3 = t3.reshape(1, oup)
    packed = (w1, b1, wdw, bdw, w3, b3)
    return raw, packed


# -----------------------------------------------------------------------------
# Pure-JAX reference (f32, inference-mode BN as scale/shift).
# -----------------------------------------------------------------------------
def inverted_residual_reference(x, raw, *, stride, dilation, expand_ratio,
                                inp, oup):
    (w1, s1, t1, wdw, s2, t2, w3, s3, t3) = raw
    relu6 = lambda v: jnp.clip(v, 0.0, 6.0)

    h = x
    if expand_ratio != 1:
        h = relu6(jnp.einsum('nhwc,cd->nhwd', x, w1) * s1 + t1)
    hidden = h.shape[-1]

    pad = dilation if dilation != 1 else 1
    y = jax.lax.conv_general_dilated(
        h, wdw[:, :, None, :],                      # (3,3,1,hidden) HWIO depthwise
        window_strides=(stride, stride),
        padding=((pad, pad), (pad, pad)),
        rhs_dilation=(dilation, dilation),
        dimension_numbers=('NHWC', 'HWIO', 'NHWC'),
        feature_group_count=hidden)
    y = relu6(y * s2 + t2)

    out = jnp.einsum('nhwd,do->nhwo', y, w3) * s3 + t3
    if stride == 1 and inp == oup:
        out = out + x
    return out


if __name__ == "__main__":
    key = jax.random.PRNGKey(0)
    kx, kp1, kp2 = jax.random.split(key, 3)

    N, H, W = 2, 16, 16

    # Config A: inp=oup=32, expand_ratio=4 (hidden=128), stride=1, dilation=1
    #           -> residual connection used.
    inp_a, oup_a, er_a, dil_a = 32, 32, 4, 1
    # Config B: inp=32, oup=64, expand_ratio=4, stride=1, dilation=2
    #           -> no residual connection.
    inp_b, oup_b, er_b, dil_b = 32, 64, 4, 2

    x = jax.random.normal(kx, (N, H, W, inp_a), jnp.float32)
    raw_a, packed_a = make_inverted_residual_params(kp1, inp_a, oup_a, er_a)
    raw_b, packed_b = make_inverted_residual_params(kp2, inp_b, oup_b, er_b)

    out_a = inverted_residual_apply(x, packed_a, stride=1, dilation=dil_a,
                                    has_expand=True, use_res=True)
    out_b = inverted_residual_apply(x, packed_b, stride=1, dilation=dil_b,
                                    has_expand=True, use_res=False)
    out_a, out_b = jax.block_until_ready((out_a, out_b))

    ref_a = inverted_residual_reference(x, raw_a, stride=1, dilation=dil_a,
                                        expand_ratio=er_a, inp=inp_a, oup=oup_a)
    ref_b = inverted_residual_reference(x, raw_b, stride=1, dilation=dil_b,
                                        expand_ratio=er_b, inp=inp_b, oup=oup_b)

    # bf16 MXU operands -> slightly looser tolerance than a pure f32 kernel.
    np.testing.assert_allclose(np.asarray(out_a), np.asarray(ref_a),
                               rtol=3e-2, atol=3e-2)
    np.testing.assert_allclose(np.asarray(out_b), np.asarray(ref_b),
                               rtol=3e-2, atol=3e-2)

    print("KERNEL_OK")
</pallas_src>

<mosaic_0001>
module attributes {stable_mosaic.version = 11 : i64} {
  func.func @inverted_residual_kernel(%arg0: i32, %arg1: memref<1x16x16x32xf32, #tpu.memory_space<vmem>>, %arg2: memref<32x128xbf16, #tpu.memory_space<vmem>>, %arg3: memref<1x128xf32, #tpu.memory_space<vmem>>, %arg4: memref<9x128xf32, #tpu.memory_space<vmem>>, %arg5: memref<1x128xf32, #tpu.memory_space<vmem>>, %arg6: memref<128x32xbf16, #tpu.memory_space<vmem>>, %arg7: memref<1x32xf32, #tpu.memory_space<vmem>>, %arg8: memref<1x16x16x32xf32, #tpu.memory_space<vmem>>, %arg9: memref<32x32x128xf32, #tpu.memory_space<vmem>>) attributes {dimension_semantics = [#tpu.dimension_semantics<parallel>], iteration_bounds = array<i64: 2>, scalar_prefetch = 0 : i64, scratch_operands = 1 : i64, tpu.core_type = #tpu.core_type<tc>, window_params = [{transform_indices = @transform_0, window_bounds = array<i64: 1, 16, 16, 32>}, {pipeline_mode = #tpu.pipeline_mode<synchronous>, transform_indices = @transform_1, window_bounds = array<i64: 32, 128>}, {pipeline_mode = #tpu.pipeline_mode<synchronous>, transform_indices = @transform_2, window_bounds = array<i64: 1, 128>}, {pipeline_mode = #tpu.pipeline_mode<synchronous>, transform_indices = @transform_3, window_bounds = array<i64: 9, 128>}, {pipeline_mode = #tpu.pipeline_mode<synchronous>, transform_indices = @transform_4, window_bounds = array<i64: 1, 128>}, {pipeline_mode = #tpu.pipeline_mode<synchronous>, transform_indices = @transform_5, window_bounds = array<i64: 128, 32>}, {pipeline_mode = #tpu.pipeline_mode<synchronous>, transform_indices = @transform_6, window_bounds = array<i64: 1, 32>}, {transform_indices = @transform_7, window_bounds = array<i64: 1, 16, 16, 32>}]} {
    %c0 = arith.constant 0 : index
    %c0_0 = arith.constant 0 : index
    %c0_1 = arith.constant 0 : index
    %c0_2 = arith.constant 0 : index
    %0 = vector.load %arg1[%c0, %c0_0, %c0_1, %c0_2] : memref<1x16x16x32xf32, #tpu.memory_space<vmem>>, vector<1x16x16x32xf32>
    %1 = vector.shape_cast %0 : vector<1x16x16x32xf32> to vector<16x16x32xf32>
    %2 = vector.shape_cast %1 : vector<16x16x32xf32> to vector<256x32xf32>
    %3 = arith.truncf %2 : vector<256x32xf32> to vector<256x32xbf16>
    %c0_3 = arith.constant 0 : index
    %c0_4 = arith.constant 0 : index
    %4 = vector.load %arg2[%c0_3, %c0_4] : memref<32x128xbf16, #tpu.memory_space<vmem>>, vector<32x128xbf16>
    %cst = arith.constant dense<0.000000e+00> : vector<256x128xf32>
    %5 = tpu.matmul %3, %4, %cst {dimension_numbers = #tpu.dot_dimension_numbers<[1], [0], [0], [1], [0, 0, 1, 1], [], []>} : vector<256x32xbf16>, vector<32x128xbf16>, vector<256x128xf32> -> vector<256x128xf32>
    %c0_5 = arith.constant 0 : index
    %c0_6 = arith.constant 0 : index
    %6 = vector.load %arg3[%c0_5, %c0_6] : memref<1x128xf32, #tpu.memory_space<vmem>>, vector<1x128xf32>
    %7 = vector.broadcast %6 : vector<1x128xf32> to vector<256x128xf32>
    %8 = arith.addf %5, %7 : vector<256x128xf32>
    %cst_7 = arith.constant 0.000000e+00 : f32
    %9 = vector.broadcast %cst_7 : f32 to vector<256x128xf32>
    %10 = arith.maximumf %8, %9 : vector<256x128xf32>
    %cst_8 = arith.constant 6.000000e+00 : f32
    %11 = vector.broadcast %cst_8 : f32 to vector<256x128xf32>
    %12 = arith.minimumf %10, %11 : vector<256x128xf32>
    %13 = vector.shape_cast %12 : vector<256x128xf32> to vector<16x16x128xf32>
    %cst_9 = arith.constant 0.000000e+00 : f32
    %14 = vector.broadcast %cst_9 : f32 to vector<1x18x128xf32>
    %cst_10 = arith.constant 0.000000e+00 : f32
    %15 = vector.broadcast %cst_10 : f32 to vector<16x1x128xf32>
    %c7 = arith.constant 7 : index
    %c7_11 = arith.constant 7 : index
    %c0_12 = arith.constant 0 : index
    %16 = vector.load %arg9[%c7, %c7_11, %c0_12] : memref<32x32x128xf32, #tpu.memory_space<vmem>>, vector<1x18x128xf32>
    tpu.vector_store %arg9[%c7, %c7_11, %c0_12], %14 {strides = array<i32>} : memref<32x32x128xf32, #tpu.memory_space<vmem>>, vector<1x18x128xf32>,
    %c24 = arith.constant 24 : index
    %c7_13 = arith.constant 7 : index
    %c0_14 = arith.constant 0 : index
    %17 = vector.load %arg9[%c24, %c7_13, %c0_14] : memref<32x32x128xf32, #tpu.memory_space<vmem>>, vector<1x18x128xf32>
    tpu.vector_store %arg9[%c24, %c7_13, %c0_14], %14 {strides = array<i32>} : memref<32x32x128xf32, #tpu.memory_space<vmem>>, vector<1x18x128xf32>,
    %c8 = arith.constant 8 : index
    %c7_15 = arith.constant 7 : index
    %c0_16 = arith.constant 0 : index
    %18 = vector.load %arg9[%c8, %c7_15, %c0_16] : memref<32x32x128xf32, #tpu.memory_space<vmem>>, vector<16x1x128xf32>
    tpu.vector_store %arg9[%c8, %c7_15, %c0_16], %15 {strides = array<i32>} : memref<32x32x128xf32, #tpu.memory_space<vmem>>, vector<16x1x128xf32>,
    %c8_17 = arith.constant 8 : index
    %c24_18 = arith.constant 24 : index
    %c0_19 = arith.constant 0 : index
    %19 = vector.load %arg9[%c8_17, %c24_18, %c0_19] : memref<32x32x128xf32, #tpu.memory_space<vmem>>, vector<16x1x128xf32>
    tpu.vector_store %arg9[%c8_17, %c24_18, %c0_19], %15 {strides = array<i32>} : memref<32x32x128xf32, #tpu.memory_space<vmem>>, vector<16x1x128xf32>,
    %c8_20 = arith.constant 8 : index
    %c8_21 = arith.constant 8 : index
    %c0_22 = arith.constant 0 : index
    %20 = vector.load %arg9[%c8_20, %c8_21, %c0_22] : memref<32x32x128xf32, #tpu.memory_space<vmem>>, vector<16x16x128xf32>
    tpu.vector_store %arg9[%c8_20, %c8_21, %c0_22], %13 {strides = array<i32>} : memref<32x32x128xf32, #tpu.memory_space<vmem>>, vector<16x16x128xf32>,
    %c0_23 = arith.constant 0 : index
    %c0_24 = arith.constant 0 : index
    %21 = vector.load %arg4[%c0_23, %c0_24] : memref<9x128xf32, #tpu.memory_space<vmem>>, vector<9x128xf32>
    %cst_25 = arith.constant 0.000000e+00 : f32
    %22 = vector.broadcast %cst_25 : f32 to vector<16x16x128xf32>
    %c7_26 = arith.constant 7 : index
    %c7_27 = arith.constant 7 : index
    %c0_28 = arith.constant 0 : index
    %23 = vector.load %arg9[%c7_26, %c7_27, %c0_28] : memref<32x32x128xf32, #tpu.memory_space<vmem>>, vector<16x16x128xf32>
    %24 = vector.extract_strided_slice %21 {offsets = [0, 0], sizes = [1, 128], strides = [1, 1]} : vector<9x128xf32> to vector<1x128xf32>
    %25 = vector.shape_cast %24 : vector<1x128xf32> to vector<128xf32>
    %26 = vector.shape_cast %25 : vector<128xf32> to vector<1x1x128xf32>
    %27 = vector.broadcast %26 : vector<1x1x128xf32> to vector<16x16x128xf32>
    %28 = arith.mulf %23, %27 : vector<16x16x128xf32>
    %29 = arith.addf %22, %28 : vector<16x16x128xf32>
    %c7_29 = arith.constant 7 : index
    %c8_30 = arith.constant 8 : index
    %c0_31 = arith.constant 0 : index
    %30 = vector.load %arg9[%c7_29, %c8_30, %c0_31] : memref<32x32x128xf32, #tpu.memory_space<vmem>>, vector<16x16x128xf32>
    %31 = vector.extract_strided_slice %21 {offsets = [1, 0], sizes = [1, 128], strides = [1, 1]} : vector<9x128xf32> to vector<1x128xf32>
    %32 = vector.shape_cast %31 : vector<1x128xf32> to vector<128xf32>
    %33 = vector.shape_cast %32 : vector<128xf32> to vector<1x1x128xf32>
    %34 = vector.broadcast %33 : vector<1x1x128xf32> to vector<16x16x128xf32>
    %35 = arith.mulf %30, %34 : vector<16x16x128xf32>
    %36 = arith.addf %29, %35 : vector<16x16x128xf32>
    %c7_32 = arith.constant 7 : index
    %c9 = arith.constant 9 : index
    %c0_33 = arith.constant 0 : index
    %37 = vector.load %arg9[%c7_32, %c9, %c0_33] : memref<32x32x128xf32, #tpu.memory_space<vmem>>, vector<16x16x128xf32>
    %38 = vector.extract_strided_slice %21 {offsets = [2, 0], sizes = [1, 128], strides = [1, 1]} : vector<9x128xf32> to vector<1x128xf32>
    %39 = vector.shape_cast %38 : vector<1x128xf32> to vector<128xf32>
    %40 = vector.shape_cast %39 : vector<128xf32> to vector<1x1x128xf32>
    %41 = vector.broadcast %40 : vector<1x1x128xf32> to vector<16x16x128xf32>
    %42 = arith.mulf %37, %41 : vector<16x16x128xf32>
    %43 = arith.addf %36, %42 : vector<16x16x128xf32>
    %c8_34 = arith.constant 8 : index
    %c7_35 = arith.constant 7 : index
    %c0_36 = arith.constant 0 : index
    %44 = vector.load %arg9[%c8_34, %c7_35, %c0_36] : memref<32x32x128xf32, #tpu.memory_space<vmem>>, vector<16x16x128xf32>
    %45 = vector.extract_strided_slice %21 {offsets = [3, 0], sizes = [1, 128], strides = [1, 1]} : vector<9x128xf32> to vector<1x128xf32>
    %46 = vector.shape_cast %45 : vector<1x128xf32> to vector<128xf32>
    %47 = vector.shape_cast %46 : vector<128xf32> to vector<1x1x128xf32>
    %48 = vector.broadcast %47 : vector<1x1x128xf32> to vector<16x16x128xf32>
    %49 = arith.mulf %44, %48 : vector<16x16x128xf32>
    %50 = arith.addf %43, %49 : vector<16x16x128xf32>
    %c8_37 = arith.constant 8 : index
    %c8_38 = arith.constant 8 : index
    %c0_39 = arith.constant 0 : index
    %51 = vector.load %arg9[%c8_37, %c8_38, %c0_39] : memref<32x32x128xf32, #tpu.memory_space<vmem>>, vector<16x16x128xf32>
    %52 = vector.extract_strided_slice %21 {offsets = [4, 0], sizes = [1, 128], strides = [1, 1]} : vector<9x128xf32> to vector<1x128xf32>
    %53 = vector.shape_cast %52 : vector<1x128xf32> to vector<128xf32>
    %54 = vector.shape_cast %53 : vector<128xf32> to vector<1x1x128xf32>
    %55 = vector.broadcast %54 : vector<1x1x128xf32> to vector<16x16x128xf32>
    %56 = arith.mulf %51, %55 : vector<16x16x128xf32>
    %57 = arith.addf %50, %56 : vector<16x16x128xf32>
    %c8_40 = arith.constant 8 : index
    %c9_41 = arith.constant 9 : index
    %c0_42 = arith.constant 0 : index
    %58 = vector.load %arg9[%c8_40, %c9_41, %c0_42] : memref<32x32x128xf32, #tpu.memory_space<vmem>>, vector<16x16x128xf32>
    %59 = vector.extract_strided_slice %21 {offsets = [5, 0], sizes = [1, 128], strides = [1, 1]} : vector<9x128xf32> to vector<1x128xf32>
    %60 = vector.shape_cast %59 : vector<1x128xf32> to vector<128xf32>
    %61 = vector.shape_cast %60 : vector<128xf32> to vector<1x1x128xf32>
    %62 = vector.broadcast %61 : vector<1x1x128xf32> to vector<16x16x128xf32>
    %63 = arith.mulf %58, %62 : vector<16x16x128xf32>
    %64 = arith.addf %57, %63 : vector<16x16x128xf32>
    %c9_43 = arith.constant 9 : index
    %c7_44 = arith.constant 7 : index
    %c0_45 = arith.constant 0 : index
    %65 = vector.load %arg9[%c9_43, %c7_44, %c0_45] : memref<32x32x128xf32, #tpu.memory_space<vmem>>, vector<16x16x128xf32>
    %66 = vector.extract_strided_slice %21 {offsets = [6, 0], sizes = [1, 128], strides = [1, 1]} : vector<9x128xf32> to vector<1x128xf32>
    %67 = vector.shape_cast %66 : vector<1x128xf32> to vector<128xf32>
    %68 = vector.shape_cast %67 : vector<128xf32> to vector<1x1x128xf32>
    %69 = vector.broadcast %68 : vector<1x1x128xf32> to vector<16x16x128xf32>
    %70 = arith.mulf %65, %69 : vector<16x16x128xf32>
    %71 = arith.addf %64, %70 : vector<16x16x128xf32>
    %c9_46 = arith.constant 9 : index
    %c8_47 = arith.constant 8 : index
    %c0_48 = arith.constant 0 : index
    %72 = vector.load %arg9[%c9_46, %c8_47, %c0_48] : memref<32x32x128xf32, #tpu.memory_space<vmem>>, vector<16x16x128xf32>
    %73 = vector.extract_strided_slice %21 {offsets = [7, 0], sizes = [1, 128], strides = [1, 1]} : vector<9x128xf32> to vector<1x128xf32>
    %74 = vector.shape_cast %73 : vector<1x128xf32> to vector<128xf32>
    %75 = vector.shape_cast %74 : vector<128xf32> to vector<1x1x128xf32>
    %76 = vector.broadcast %75 : vector<1x1x128xf32> to vector<16x16x128xf32>
    %77 = arith.mulf %72, %76 : vector<16x16x128xf32>
    %78 = arith.addf %71, %77 : vector<16x16x128xf32>
    %c9_49 = arith.constant 9 : index
    %c9_50 = arith.constant 9 : index
    %c0_51 = arith.constant 0 : index
    %79 = vector.load %arg9[%c9_49, %c9_50, %c0_51] : memref<32x32x128xf32, #tpu.memory_space<vmem>>, vector<16x16x128xf32>
    %80 = vector.extract_strided_slice %21 {offsets = [8, 0], sizes = [1, 128], strides = [1, 1]} : vector<9x128xf32> to vector<1x128xf32>
    %81 = vector.shape_cast %80 : vector<1x128xf32> to vector<128xf32>
    %82 = vector.shape_cast %81 : vector<128xf32> to vector<1x1x128xf32>
    %83 = vector.broadcast %82 : vector<1x1x128xf32> to vector<16x16x128xf32>
    %84 = arith.mulf %79, %83 : vector<16x16x128xf32>
    %85 = arith.addf %78, %84 : vector<16x16x128xf32>
    %86 = vector.shape_cast %85 : vector<16x16x128xf32> to vector<256x128xf32>
    %c0_52 = arith.constant 0 : index
    %c0_53 = arith.constant 0 : index
    %87 = vector.load %arg5[%c0_52, %c0_53] : memref<1x128xf32, #tpu.memory_space<vmem>>, vector<1x128xf32>
    %88 = vector.broadcast %87 : vector<1x128xf32> to vector<256x128xf32>
    %89 = arith.addf %86, %88 : vector<256x128xf32>
    %cst_54 = arith.constant 0.000000e+00 : f32
    %90 = vector.broadcast %cst_54 : f32 to vector<256x128xf32>
    %91 = arith.maximumf %89, %90 : vector<256x128xf32>
    %cst_55 = arith.constant 6.000000e+00 : f32
    %92 = vector.broadcast %cst_55 : f32 to vector<256x128xf32>
    %93 = arith.minimumf %91, %92 : vector<256x128xf32>
    %94 = arith.truncf %93 : vector<256x128xf32> to vector<256x128xbf16>
    %c0_56 = arith.constant 0 : index
    %c0_57 = arith.constant 0 : index
    %95 = vector.load %arg6[%c0_56, %c0_57] : memref<128x32xbf16, #tpu.memory_space<vmem>>, vector<128x32xbf16>
    %cst_58 = arith.constant dense<0.000000e+00> : vector<256x32xf32>
    %96 = tpu.matmul %94, %95, %cst_58 {dimension_numbers = #tpu.dot_dimension_numbers<[1], [0], [0], [1], [0, 0, 1, 1], [], []>} : vector<256x128xbf16>, vector<128x32xbf16>, vector<256x32xf32> -> vector<256x32xf32>
    %c0_59 = arith.constant 0 : index
    %c0_60 = arith.constant 0 : index
    %97 = vector.load %arg7[%c0_59, %c0_60] : memref<1x32xf32, #tpu.memory_space<vmem>>, vector<1x32xf32>
    %98 = vector.broadcast %97 : vector<1x32xf32> to vector<256x32xf32>
    %99 = arith.addf %96, %98 : vector<256x32xf32>
    %100 = arith.addf %99, %2 : vector<256x32xf32>
    %101 = vector.shape_cast %100 : vector<256x32xf32> to vector<1x16x16x32xf32>
    %c0_61 = arith.constant 0 : index
    %c0_62 = arith.constant 0 : index
    %c0_63 = arith.constant 0 : index
    %c0_64 = arith.constant 0 : index
    %102 = vector.load %arg8[%c0_61, %c0_62, %c0_63, %c0_64] : memref<1x16x16x32xf32, #tpu.memory_space<vmem>>, vector<1x16x16x32xf32>
    tpu.vector_store %arg8[%c0_61, %c0_62, %c0_63, %c0_64], %101 {strides = array<i32>} : memref<1x16x16x32xf32, #tpu.memory_space<vmem>>, vector<1x16x16x32xf32>,
    return
  }
  func.func @transform_0(%arg0: i32) -> (i32, i32, i32, i32) {
    %c0_i32 = arith.constant 0 : i32
    %c0_i32_0 = arith.constant 0 : i32
    %c0_i32_1 = arith.constant 0 : i32
    %c0_i32_2 = arith.constant 0 : i32
    return %arg0, %c0_i32, %c0_i32_0, %c0_i32_1 : i32, i32, i32, i32
  }
  func.func @transform_1(%arg0: i32) -> (i32, i32) {
    %c0_i32 = arith.constant 0 : i32
    %c0_i32_0 = arith.constant 0 : i32
    %c0_i32_1 = arith.constant 0 : i32
    return %c0_i32, %c0_i32_0 : i32, i32
  }
  func.func @transform_2(%arg0: i32) -> (i32, i32) {
    %c0_i32 = arith.constant 0 : i32
    %c0_i32_0 = arith.constant 0 : i32
    %c0_i32_1 = arith.constant 0 : i32
    return %c0_i32, %c0_i32_0 : i32, i32
  }
  func.func @transform_3(%arg0: i32) -> (i32, i32) {
    %c0_i32 = arith.constant 0 : i32
    %c0_i32_0 = arith.constant 0 : i32
    %c0_i32_1 = arith.constant 0 : i32
    return %c0_i32, %c0_i32_0 : i32, i32
  }
  func.func @transform_4(%arg0: i32) -> (i32, i32) {
    %c0_i32 = arith.constant 0 : i32
    %c0_i32_0 = arith.constant 0 : i32
    %c0_i32_1 = arith.constant 0 : i32
    return %c0_i32, %c0_i32_0 : i32, i32
  }
  func.func @transform_5(%arg0: i32) -> (i32, i32) {
    %c0_i32 = arith.constant 0 : i32
    %c0_i32_0 = arith.constant 0 : i32
    %c0_i32_1 = arith.constant 0 : i32
    return %c0_i32, %c0_i32_0 : i32, i32
  }
  func.func @transform_6(%arg0: i32) -> (i32, i32) {
    %c0_i32 = arith.constant 0 : i32
    %c0_i32_0 = arith.constant 0 : i32
    %c0_i32_1 = arith.constant 0 : i32
    return %c0_i32, %c0_i32_0 : i32, i32
  }
  func.func @transform_7(%arg0: i32) -> (i32, i32, i32, i32) {
    %c0_i32 = arith.constant 0 : i32
    %c0_i32_0 = arith.constant 0 : i32
    %c0_i32_1 = arith.constant 0 : i32
    %c0_i32_2 = arith.constant 0 : i32
    return %arg0, %c0_i32, %c0_i32_0, %c0_i32_1 : i32, i32, i32, i32
  }
}

</mosaic_0001>

<llo_original>
// kernel: tpu_custom_call.1
$region0: #{tpu_custom_call.1}
  #allocation0 [shape = 'u32[]', space=smem, size = 0x4, offset = 0x4, fixed_abs, tag = 'smem constant byte address 0x4 - core index']
  #allocation1 [shape = 'u32[144,128]{1,0:T(1,128)}', space=vmem, size = 0x12000, scoped, tag = 'internal scratch']
  #allocation2 [shape = 'f32[32,32,128]{2,1,0:T(8,128)}', space=vmem, size = 0x80000, scoped, tag = 'scratch operand']
  %s0 = inlined_call_operand.hbm [shape: f32[2,16,16,32], index: 0, kind: input, shape index: {}]
  %s1 = inlined_call_operand.vmem [shape: bf16[32,128], index: 1, kind: input, shape index: {}]
  %s2 = inlined_call_operand.vmem [shape: f32[1,128], index: 2, kind: input, shape index: {}]
  %s3 = inlined_call_operand.vmem [shape: f32[9,128], index: 3, kind: input, shape index: {}]
  %s4 = inlined_call_operand.vmem [shape: f32[1,128], index: 4, kind: input, shape index: {}]
  %s5 = inlined_call_operand.vmem [shape: bf16[128,32], index: 5, kind: input, shape index: {}]
  %s6 = inlined_call_operand.vmem [shape: f32[1,32], index: 6, kind: input, shape index: {}]
  %s7 = inlined_call_operand.hbm [shape: f32[2,16,16,32], index: 7, kind: output, shape index: {}]
  %s8 = sld [smem:[#allocation0]]
  $region65: #{tpu_custom_call.1} parent=0
    _
  %s10 = ssub.s32 1, %s8
  %s11 = scalar_select 0, %s10, %s8
  $region1: #{tpu_custom_call.1} parent=0
    #allocation3 [shape = 'u8[262144]{0}', space=vmem, size = 0x40000, scoped, tag = 'input window, operand 0']
    #allocation4 [shape = 's32[2]{0}', space=sflag, size = 0x8, scoped, tag = 'scoped memory for tpu_custom_call.1']
    #allocation5 [shape = 's32[2]{0}', space=sflag, size = 0x8, scoped, tag = 'scoped memory for tpu_custom_call.1']
    #allocation6 [shape = 'u8[262144]{0}', space=vmem, size = 0x40000, scoped, tag = 'output window, operand 0']
    %12 = vsyncpa [#allocation4], 0
    %s13 = scalar_lea.sflag [#allocation4], 1
    %14 = vsyncpa %s13, 0
    %15 = vsyncpa [#allocation5], 0
    %s16 = scalar_lea.sflag [#allocation5], 1
    %17 = vsyncpa %s16, 0
    loop: start=0, step=1, limit=4
    $region2: #{tpu_custom_call.1} parent=1 // loop_pre_header
      _
    $region3: #{tpu_custom_call.1} parent=1 // loop_header
      %s19 = sphi 0, %s23
      %p20 = scmp.ge.s32.totalorder %s19, 4
      %s29 = sphi 0, %s31
      %s32 = sphi 0, %s29
      %s33 = sphi 0, %s32
      %s49 = sphi 0, %s33
      %s53 = sphi 0, %s53
      %s55 = sphi 0, %s53
      %s56 = sphi 0, %s55
      %s70 = sphi 0, %s56
      %s74 = sphi 0, %s74
      %s76 = sphi 0, %s74
      %s77 = sphi 0, %s76
      %s91 = sphi 0, %s77
      %s95 = sphi 0, %s95
      %s97 = sphi 0, %s95
      %s98 = sphi 0, %s97
      %s112 = sphi 0, %s98
      %s116 = sphi 0, %s116
      %s118 = sphi 0, %s116
      %s119 = sphi 0, %s118
      %s133 = sphi 0, %s119
      %s137 = sphi 0, %s137
      %s139 = sphi 0, %s137
      %s140 = sphi 0, %s139
      %s154 = sphi 0, %s140
      %s158 = sphi 0, %s158
      %s160 = sphi 0, %s158
      %s161 = sphi 0, %s160
      %s175 = sphi 0, %s161
      %s181 = sphi 0, %s183
      %s184 = sphi 0, %s181
      %s185 = sphi 0, %s184
      %s201 = sphi 0, %s185
    $region4: #{tpu_custom_call.1} parent=1 // loop_header_branch
      %22 = sbr.rel (%p20) target = $region8
    $region5: #{tpu_custom_call.1} parent=1 // loop_body
      %s24 = ssub.s32 %s19, 1
      %s25 = ssub.s32 %s19, 2
      %s26 = sadd.s32 %s19, 1
      %s27 = ssub.s32 %s19, %s26
      %p28 = scmp.eq.s32.totalorder %s27, 0
      %s30 = sadd.s32 %s29, 1
      %s31 = scalar_select %p28, %s29, %s30
      %p34 = pneg %p28
      %p35 = scmp.eq.s32.totalorder %s19, 1
      %p36 = por %p34, %p35
      %p37 = scmp.ne.s32.totalorder %s29, %s32
      %p38 = scmp.eq.s32.totalorder %s19, 0
      %p39 = por %p37, %p38
      %p40 = scmp.ne.s32.totalorder %s29, %s32
      %p41 = scmp.eq.s32.totalorder %s24, 1
      %p42 = por %p40, %p41
      %p43 = scmp.ne.s32.totalorder %s32, %s33
      %p44 = scmp.eq.s32.totalorder %s24, 0
      %p45 = por %p43, %p44
      %p46 = scmp.ne.s32.totalorder %s32, %s33
      %p47 = scmp.eq.s32.totalorder %s25, 1
      %p48 = por %p46, %p47
      %p50 = scmp.ne.s32.totalorder %s33, %s49
      %p51 = scmp.eq.s32.totalorder %s25, 0
      %p52 = por %p50, %p51
      %s54 = sadd.s32 %s53, 1
      %p57 = scmp.eq.s32.totalorder %s19, 1
      %p58 = scmp.ne.s32.totalorder %s53, %s55
      %p59 = scmp.eq.s32.totalorder %s19, 0
      %p60 = por %p58, %p59
      %p61 = scmp.ne.s32.totalorder %s53, %s55
      %p62 = scmp.eq.s32.totalorder %s24, 1
      %p63 = por %p61, %p62
      %p64 = scmp.ne.s32.totalorder %s55, %s56
      %p65 = scmp.eq.s32.totalorder %s24, 0
      %p66 = por %p64, %p65
      %p67 = scmp.ne.s32.totalorder %s55, %s56
      %p68 = scmp.eq.s32.totalorder %s25, 1
      %p69 = por %p67, %p68
      %p71 = scmp.ne.s32.totalorder %s56, %s70
      %p72 = scmp.eq.s32.totalorder %s25, 0
      %p73 = por %p71, %p72
      %s75 = sadd.s32 %s74, 1
      %p78 = scmp.eq.s32.totalorder %s19, 1
      %p79 = scmp.ne.s32.totalorder %s74, %s76
      %p80 = scmp.eq.s32.totalorder %s19, 0
      %p81 = por %p79, %p80
      %p82 = scmp.ne.s32.totalorder %s74, %s76
      %p83 = scmp.eq.s32.totalorder %s24, 1
      %p84 = por %p82, %p83
      %p85 = scmp.ne.s32.totalorder %s76, %s77
      %p86 = scmp.eq.s32.totalorder %s24, 0
      %p87 = por %p85, %p86
      %p88 = scmp.ne.s32.totalorder %s76, %s77
      %p89 = scmp.eq.s32.totalorder %s25, 1
      %p90 = por %p88, %p89
      %p92 = scmp.ne.s32.totalorder %s77, %s91
      %p93 = scmp.eq.s32.totalorder %s25, 0
      %p94 = por %p92, %p93
      %s96 = sadd.s32 %s95, 1
      %p99 = scmp.eq.s32.totalorder %s19, 1
      %p100 = scmp.ne.s32.totalorder %s95, %s97
      %p101 = scmp.eq.s32.totalorder %s19, 0
      %p102 = por %p100, %p101
      %p103 = scmp.ne.s32.totalorder %s95, %s97
      %p104 = scmp.eq.s32.totalorder %s24, 1
      %p105 = por %p103, %p104
      %p106 = scmp.ne.s32.totalorder %s97, %s98
      %p107 = scmp.eq.s32.totalorder %s24, 0
      %p108 = por %p106, %p107
      %p109 = scmp.ne.s32.totalorder %s97, %s98
      %p110 = scmp.eq.s32.totalorder %s25, 1
      %p111 = por %p109, %p110
      %p113 = scmp.ne.s32.totalorder %s98, %s112
      %p114 = scmp.eq.s32.totalorder %s25, 0
      %p115 = por %p113, %p114
      %s117 = sadd.s32 %s116, 1
      %p120 = scmp.eq.s32.totalorder %s19, 1
      %p121 = scmp.ne.s32.totalorder %s116, %s118
      %p122 = scmp.eq.s32.totalorder %s19, 0
      %p123 = por %p121, %p122
      %p124 = scmp.ne.s32.totalorder %s116, %s118
      %p125 = scmp.eq.s32.totalorder %s24, 1
      %p126 = por %p124, %p125
      %p127 = scmp.ne.s32.totalorder %s118, %s119
      %p128 = scmp.eq.s32.totalorder %s24, 0
      %p129 = por %p127, %p128
      %p130 = scmp.ne.s32.totalorder %s118, %s119
      %p131 = scmp.eq.s32.totalorder %s25, 1
      %p132 = por %p130, %p131
      %p134 = scmp.ne.s32.totalorder %s119, %s133
      %p135 = scmp.eq.s32.totalorder %s25, 0
      %p136 = por %p134, %p135
      %s138 = sadd.s32 %s137, 1
      %p141 = scmp.eq.s32.totalorder %s19, 1
      %p142 = scmp.ne.s32.totalorder %s137, %s139
      %p143 = scmp.eq.s32.totalorder %s19, 0
      %p144 = por %p142, %p143
      %p145 = scmp.ne.s32.totalorder %s137, %s139
      %p146 = scmp.eq.s32.totalorder %s24, 1
      %p147 = por %p145, %p146
      %p148 = scmp.ne.s32.totalorder %s139, %s140
      %p149 = scmp.eq.s32.totalorder %s24, 0
      %p150 = por %p148, %p149
      %p151 = scmp.ne.s32.totalorder %s139, %s140
      %p152 = scmp.eq.s32.totalorder %s25, 1
      %p153 = por %p151, %p152
      %p155 = scmp.ne.s32.totalorder %s140, %s154
      %p156 = scmp.eq.s32.totalorder %s25, 0
      %p157 = por %p155, %p156
      %s159 = sadd.s32 %s158, 1
      %p162 = scmp.eq.s32.totalorder %s19, 1
      %p163 = scmp.ne.s32.totalorder %s158, %s160
      %p164 = scmp.eq.s32.totalorder %s19, 0
      %p165 = por %p163, %p164
      %p166 = scmp.ne.s32.totalorder %s158, %s160
      %p167 = scmp.eq.s32.totalorder %s24, 1
      %p168 = por %p166, %p167
      %p169 = scmp.ne.s32.totalorder %s160, %s161
      %p170 = scmp.eq.s32.totalorder %s24, 0
      %p171 = por %p169, %p170
      %p172 = scmp.ne.s32.totalorder %s160, %s161
      %p173 = scmp.eq.s32.totalorder %s25, 1
      %p174 = por %p172, %p173
      %p176 = scmp.ne.s32.totalorder %s161, %s175
      %p177 = scmp.eq.s32.totalorder %s25, 0
      %p178 = por %p176, %p177
      %s179 = ssub.s32 %s19, %s26
      %p180 = scmp.eq.s32.totalorder %s179, 0
      %s182 = sadd.s32 %s181, 1
      %s183 = scalar_select %p180, %s181, %s182
      %p186 = pneg %p180
      %p187 = scmp.eq.s32.totalorder %s19, 1
      %p188 = por %p186, %p187
      %p189 = scmp.ne.s32.totalorder %s181, %s184
      %p190 = scmp.eq.s32.totalorder %s19, 0
      %p191 = por %p189, %p190
      %p192 = scmp.ne.s32.totalorder %s181, %s184
      %p193 = scmp.eq.s32.totalorder %s24, 1
      %p194 = por %p192, %p193
      %p195 = scmp.ne.s32.totalorder %s184, %s185
      %p196 = scmp.eq.s32.totalorder %s24, 0
      %p197 = por %p195, %p196
      %p198 = scmp.ne.s32.totalorder %s184, %s185
      %p199 = scmp.eq.s32.totalorder %s25, 1
      %p200 = por %p198, %p199
      %p202 = scmp.ne.s32.totalorder %s185, %s201
      %p203 = scmp.eq.s32.totalorder %s25, 0
      %p204 = por %p202, %p203
      %p205 = scmp.le.s32.totalorder 1, %s19
      %p206 = scmp.lt.s32.totalorder %s19, 3
      %p207 = pnand %p205, %p206
      %p208 = pneg %p207
      // Predicated region
      $region9: #{tpu_custom_call.1} parent=5 // pred_check
        _
      $region10: #{tpu_custom_call.1} parent=5 // pred_check_branch
        %210 = sbr.rel (%p207) target = $region12
      $region11: #{tpu_custom_call.1} parent=5 // pred_region
        %s211 = ssub.s32 %s19, 1
        // Predicated region
        $region13: #{tpu_custom_call.1} parent=11 // pred_check
          %p212 = pneg %p66
        $region14: #{tpu_custom_call.1} parent=11 // pred_check_branch
          %214 = sbr.rel (%p212) target = $region16
        $region15: #{tpu_custom_call.1} parent=11 // pred_region
          _
        $region16: #{tpu_custom_call.1} parent=11 // pred_fallthru
          _
        // Predicated region
        $region17: #{tpu_custom_call.1} parent=11 // pred_check
          %p215 = pneg %p87
        $region18: #{tpu_custom_call.1} parent=11 // pred_check_branch
          %217 = sbr.rel (%p215) target = $region20
        $region19: #{tpu_custom_call.1} parent=11 // pred_region
          _
        $region20: #{tpu_custom_call.1} parent=11 // pred_fallthru
          _
        // Predicated region
        $region21: #{tpu_custom_call.1} parent=11 // pred_check
          %p218 = pneg %p108
        $region22: #{tpu_custom_call.1} parent=11 // pred_check_branch
          %220 = sbr.rel (%p218) target = $region24
        $region23: #{tpu_custom_call.1} parent=11 // pred_region
          _
        $region24: #{tpu_custom_call.1} parent=11 // pred_fallthru
          _
        // Predicated region
        $region25: #{tpu_custom_call.1} parent=11 // pred_check
          %p221 = pneg %p129
        $region26: #{tpu_custom_call.1} parent=11 // pred_check_branch
          %223 = sbr.rel (%p221) target = $region28
        $region27: #{tpu_custom_call.1} parent=11 // pred_region
          _
        $region28: #{tpu_custom_call.1} parent=11 // pred_fallthru
          _
        // Predicated region
        $region29: #{tpu_custom_call.1} parent=11 // pred_check
          %p224 = pneg %p150
        $region30: #{tpu_custom_call.1} parent=11 // pred_check_branch
          %226 = sbr.rel (%p224) target = $region32
        $region31: #{tpu_custom_call.1} parent=11 // pred_region
          _
        $region32: #{tpu_custom_call.1} parent=11 // pred_fallthru
          _
        // Predicated region
        $region33: #{tpu_custom_call.1} parent=11 // pred_check
          %p227 = pneg %p171
        $region34: #{tpu_custom_call.1} parent=11 // pred_check_branch
          %229 = sbr.rel (%p227) target = $region36
        $region35: #{tpu_custom_call.1} parent=11 // pred_region
          _
        $region36: #{tpu_custom_call.1} parent=11 // pred_fallthru
          _
      $region12: #{tpu_custom_call.1} parent=5 // pred_fallthru
        _
      %p230 = scmp.lt.s32.totalorder %s19, 2
      // Predicated region
      $region37: #{tpu_custom_call.1} parent=5 // pred_check
        %p231 = pneg %p230
      $region38: #{tpu_custom_call.1} parent=5 // pred_check_branch
        %233 = sbr.rel (%p231) target = $region40
      $region39: #{tpu_custom_call.1} parent=5 // pred_region
        // Predicated region
        $region41: #{tpu_custom_call.1} parent=39 // pred_check
          %p234 = pneg %p39
        $region42: #{tpu_custom_call.1} parent=39 // pred_check_branch
          %236 = sbr.rel (%p234) target = $region44
        $region43: #{tpu_custom_call.1} parent=39 // pred_region
          %s237 = sand.u32 %s29, 1
          %s238 = scalar_lea.sflag [#allocation4], %s237
          %s239 = sand.u32 %s29, 1
          %s240 = smul.addr %s239, 256
          %s241 = scalar_lea.vmem [#allocation3], %s240
          %s243 = ssub.s32 4096, 4096
          %244 = vsyncadd %s238, %s243
          %s245 = smul.addr %s19, 32
          %s246 = smul.addr %s245, 128
          %s247 = scalar_lea.hbm %s0, %s246
          %s248 = sshll.u32 %s241, 4
          %s249 = int_to_ptr.vmem [resolvable:$true] %s248
          %254 = dma.hbm_to_vmem [thread:$0]  %s247, 4096, %s249, %s238, 128, 128, 8
        $region44: #{tpu_custom_call.1} parent=39 // pred_fallthru
          _
      $region40: #{tpu_custom_call.1} parent=5 // pred_fallthru
        _
      %p255 = scmp.le.s32.totalorder 1, %s19
      %p256 = scmp.lt.s32.totalorder %s19, 3
      %p257 = pnand %p255, %p256
      %p258 = pneg %p257
      // Predicated region
      $region45: #{tpu_custom_call.1} parent=5 // pred_check
        _
      $region46: #{tpu_custom_call.1} parent=5 // pred_check_branch
        %260 = sbr.rel (%p257) target = $region48
      $region47: #{tpu_custom_call.1} parent=5 // pred_region
        %s261 = ssub.s32 %s19, 1
        %s262 = sand.u32 %s32, 1
        %s263 = scalar_lea.sflag [#allocation4], %s262
        %s264 = sand.u32 %s32, 1
        %s265 = smul.addr %s264, 256
        %s266 = scalar_lea.vmem [#allocation3], %s265
        // Predicated region
        $region49: #{tpu_custom_call.1} parent=47 // pred_check
          %p267 = pneg %p45
        $region50: #{tpu_custom_call.1} parent=47 // pred_check_branch
          %269 = sbr.rel (%p267) target = $region52
        $region51: #{tpu_custom_call.1} parent=47 // pred_region
          %270 = dma.done %s263, 4096
        $region52: #{tpu_custom_call.1} parent=47 // pred_fallthru
          _
        %s271 = sand.u32 %s32, 1
        %s272 = scalar_lea.sflag [#allocation4], %s271
        %s273 = sand.u32 %s32, 1
        %s274 = smul.addr %s273, 256
        %s275 = scalar_lea.vmem [#allocation3], %s274
        %p276 = pneg %p45
        %p277 = pneg %p42
        %p278 = pneg %p66
        %p279 = pneg %p63
        %p280 = pneg %p87
        %p281 = pneg %p84
        %p282 = pneg %p108
        %p283 = pneg %p105
        %p284 = pneg %p129
        %p285 = pneg %p126
        %p286 = pneg %p150
        %p287 = pneg %p147
        %p288 = pneg %p171
        %p289 = pneg %p168
        %p290 = pneg %p197
        %p291 = pneg %p194
        %s292 = sand.u32 %s184, 1
        %s293 = scalar_lea.sflag [#allocation5], %s292
        %s294 = sand.u32 %s184, 1
        %s295 = smul.addr %s294, 256
        %s296 = scalar_lea.vmem [#allocation6], %s295
        %v298 = vld [vmem:[%s266] sm:$0xff]
        %v299 = vld [vmem:[%s266 + $0x8] sm:$0xff]
        %v300 = vld [vmem:[%s266 + $0x10] sm:$0xff]
        %v301 = vld [vmem:[%s266 + $0x18] sm:$0xff]
        %v302 = vld [vmem:[%s266 + $0x20] sm:$0xff]
        %v303 = vld [vmem:[%s266 + $0x28] sm:$0xff]
        %v304 = vld [vmem:[%s266 + $0x30] sm:$0xff]
        %v305 = vld [vmem:[%s266 + $0x38] sm:$0xff]
        %v306 = vld [vmem:[%s266 + $0x40] sm:$0xff]
        %v307 = vld [vmem:[%s266 + $0x48] sm:$0xff]
        %v308 = vld [vmem:[%s266 + $0x50] sm:$0xff]
        %v309 = vld [vmem:[%s266 + $0x58] sm:$0xff]
        %v310 = vld [vmem:[%s266 + $0x60] sm:$0xff]
        %v311 = vld [vmem:[%s266 + $0x68] sm:$0xff]
        %v312 = vld [vmem:[%s266 + $0x70] sm:$0xff]
        %v313 = vld [vmem:[%s266 + $0x78] sm:$0xff]
        %v314 = vld [vmem:[%s266 + $0x80] sm:$0xff]
        %v315 = vld [vmem:[%s266 + $0x88] sm:$0xff]
        %v316 = vld [vmem:[%s266 + $0x90] sm:$0xff]
        %v317 = vld [vmem:[%s266 + $0x98] sm:$0xff]
        %v318 = vld [vmem:[%s266 + $0xa0] sm:$0xff]
        %v319 = vld [vmem:[%s266 + $0xa8] sm:$0xff]
        %v320 = vld [vmem:[%s266 + $0xb0] sm:$0xff]
        %v321 = vld [vmem:[%s266 + $0xb8] sm:$0xff]
        %v322 = vld [vmem:[%s266 + $0xc0] sm:$0xff]
        %v323 = vld [vmem:[%s266 + $0xc8] sm:$0xff]
        %v324 = vld [vmem:[%s266 + $0xd0] sm:$0xff]
        %v325 = vld [vmem:[%s266 + $0xd8] sm:$0xff]
        %v326 = vld [vmem:[%s266 + $0xe0] sm:$0xff]
        %v327 = vld [vmem:[%s266 + $0xe8] sm:$0xff]
        %v328 = vld [vmem:[%s266 + $0xf0] sm:$0xff]
        %v329 = vld [vmem:[%s266 + $0xf8] sm:$0xff]
        %v330 = vpack.c.bf16 %v299, %v298
        %v331 = vpack.c.bf16 %v301, %v300
        %v332 = vpack.c.bf16 %v303, %v302
        %v333 = vpack.c.bf16 %v305, %v304
        %v334 = vpack.c.bf16 %v307, %v306
        %v335 = vpack.c.bf16 %v309, %v308
        %v336 = vpack.c.bf16 %v311, %v310
        %v337 = vpack.c.bf16 %v313, %v312
        %v338 = vpack.c.bf16 %v315, %v314
        %v339 = vpack.c.bf16 %v317, %v316
        %v340 = vpack.c.bf16 %v319, %v318
        %v341 = vpack.c.bf16 %v321, %v320
        %v342 = vpack.c.bf16 %v323, %v322
        %v343 = vpack.c.bf16 %v325, %v324
        %v344 = vpack.c.bf16 %v327, %v326
        %v345 = vpack.c.bf16 %v329, %v328
        %v346 = vld [vmem:[%s1] sm:$0xf]
        %v347 = vld [vmem:[%s1 + $0x4] sm:$0xf]
        %v348 = vld [vmem:[%s1 + $0x8] sm:$0xf]
        %v349 = vld [vmem:[%s1 + $0xc] sm:$0xf]
        %v350 = vld [vmem:[%s2] sm:$0x1]
        %v352 = vlaneseq
        %v353 = vshrl.u32 %v352, 7
        %v354 = vsub.s32 0, %v353
        %v355 = vrot.slane %v350, %v354
        %v361 = vunpack.c.l.b16 %v346
        %v362 = vunpack.c.l.b16 %v347
        %v363 = vunpack.c.l.b16 %v348
        %v364 = vunpack.c.l.b16 %v349
        %v365 = vpack.c.b16 %v362, %v361
        %v366 = vpack.c.b16 %v364, %v363
        %vm369 = vcmask 261120
        %v371 = vsel %vm369, %v330, 0
        %v374 = vsel %vm369, %v331, 0
        %v377 = vsel %vm369, %v332, 0
        %v380 = vsel %vm369, %v333, 0
        %v383 = vsel %vm369, %v334, 0
        %v386 = vsel %vm369, %v335, 0
        %v389 = vsel %vm369, %v336, 0
        %v392 = vsel %vm369, %v337, 0
        %v395 = vsel %vm369, %v338, 0
        %v398 = vsel %vm369, %v339, 0
        %v401 = vsel %vm369, %v340, 0
        %v404 = vsel %vm369, %v341, 0
        %v407 = vsel %vm369, %v342, 0
        %v410 = vsel %vm369, %v343, 0
        %v413 = vsel %vm369, %v344, 0
        %v416 = vsel %vm369, %v345, 0
        %418 = vmatprep.subr.bf16.mxu0 0
        %419 = vmatpush1.bf16.msra.mxu0 %v365
        %420 = vmatprep.subr.bf16.mxu0 0
        %421 = vmatpush1.bf16.msra.mxu0 %v366
        %422 = vmatprep.subr.bf16.mxu0 0
        %423 = vmatpush1.bf16.msra.mxu0 0
        %424 = vmatprep.subr.bf16.mxu0 0
        %425 = vmatpush1.bf16.msra.mxu0 0
        %426 = vmatprep.subr.bf16.mxu0 0
        %427 = vmatpush1.bf16.msra.mxu0 0
        %428 = vmatprep.subr.bf16.mxu0 0
        %429 = vmatpush1.bf16.msra.mxu0 0
        %430 = vmatprep.subr.bf16.mxu0 0
        %431 = vmatpush1.bf16.msra.mxu0 0
        %432 = vmatprep.subr.bf16.mxu0 0
        %433 = vmatpush1.bf16.msra.mxu0 0
        %434 = vmatprep.subr.bf16.mxu0 0
        %435 = vmatpush1.bf16.msra.mxu0 0
        %436 = vmatprep.subr.bf16.mxu0 0
        %437 = vmatpush1.bf16.msra.mxu0 0
        %438 = vmatprep.subr.bf16.mxu0 0
        %439 = vmatpush1.bf16.msra.mxu0 0
        %440 = vmatprep.subr.bf16.mxu0 0
        %441 = vmatpush1.bf16.msra.mxu0 0
        %442 = vmatprep.subr.bf16.mxu0 0
        %443 = vmatpush1.bf16.msra.mxu0 0
        %444 = vmatprep.subr.bf16.mxu0 0
        %445 = vmatpush1.bf16.msra.mxu0 0
        %446 = vmatprep.subr.bf16.mxu0 0
        %447 = vmatpush1.bf16.msra.mxu0 0
        %448 = vmatprep.subr.bf16.mxu0 0
        %449 = vmatpush1.bf16.msra.mxu0 0
        %450 = vmatprep.mubr.bf16.mxu0 0
        %451 = vmatmul.mubr.bf16.gmra.mrb[0].mxu0 %v371
        %v452 = vpop.f32.mrb[0].mxu0
        %v453 = vadd.f32 %v355, %v452
        %v454 = vpop.f32.mrb[0].mxu0
        %v455 = vpop.f32.mrb[0].mxu0
        %v456 = vadd.f32 %v355, %v455
        %v457 = vpop.f32.mrb[0].mxu0
        %458 = vmatprep.mubr.bf16.mxu0 0
        %459 = vmatmul.mubr.bf16.gmra.mrb[0].mxu0 %v374
        %v460 = vpop.f32.mrb[0].mxu0
        %v461 = vadd.f32 %v355, %v460
        %v462 = vpop.f32.mrb[0].mxu0
        %v463 = vpop.f32.mrb[0].mxu0
        %v464 = vadd.f32 %v355, %v463
        %v465 = vpop.f32.mrb[0].mxu0
        %466 = vmatprep.mubr.bf16.mxu0 0
        %467 = vmatmul.mubr.bf16.gmra.mrb[0].mxu0 %v377
        %v468 = vpop.f32.mrb[0].mxu0
        %v469 = vadd.f32 %v355, %v468
        %v470 = vpop.f32.mrb[0].mxu0
        %v471 = vpop.f32.mrb[0].mxu0
        %v472 = vadd.f32 %v355, %v471
        %v473 = vpop.f32.mrb[0].mxu0
        %474 = vmatprep.mubr.bf16.mxu0 0
        %475 = vmatmul.mubr.bf16.gmra.mrb[0].mxu0 %v380
        %v476 = vpop.f32.mrb[0].mxu0
        %v477 = vadd.f32 %v355, %v476
        %v478 = vpop.f32.mrb[0].mxu0
        %v479 = vpop.f32.mrb[0].mxu0
        %v480 = vadd.f32 %v355, %v479
        %v481 = vpop.f32.mrb[0].mxu0
        %482 = vmatprep.mubr.bf16.mxu0 0
        %483 = vmatmul.mubr.bf16.gmra.mrb[0].mxu0 %v383
        %v484 = vpop.f32.mrb[0].mxu0
        %v485 = vadd.f32 %v355, %v484
        %v486 = vpop.f32.mrb[0].mxu0
        %v487 = vpop.f32.mrb[0].mxu0
        %v488 = vadd.f32 %v355, %v487
        %v489 = vpop.f32.mrb[0].mxu0
        %490 = vmatprep.mubr.bf16.mxu0 0
        %491 = vmatmul.mubr.bf16.gmra.mrb[0].mxu0 %v386
        %v492 = vpop.f32.mrb[0].mxu0
        %v493 = vadd.f32 %v355, %v492
        %v494 = vpop.f32.mrb[0].mxu0
        %v495 = vpop.f32.mrb[0].mxu0
        %v496 = vadd.f32 %v355, %v495
        %v497 = vpop.f32.mrb[0].mxu0
        %498 = vmatprep.mubr.bf16.mxu0 0
        %499 = vmatmul.mubr.bf16.gmra.mrb[0].mxu0 %v389
        %v500 = vpop.f32.mrb[0].mxu0
        %v501 = vadd.f32 %v355, %v500
        %v502 = vpop.f32.mrb[0].mxu0
        %v503 = vpop.f32.mrb[0].mxu0
        %v504 = vadd.f32 %v355, %v503
        %v505 = vpop.f32.mrb[0].mxu0
        %506 = vmatprep.mubr.bf16.mxu0 0
        %507 = vmatmul.mubr.bf16.gmra.mrb[0].mxu0 %v392
        %v508 = vpop.f32.mrb[0].mxu0
        %v509 = vadd.f32 %v355, %v508
        %v510 = vpop.f32.mrb[0].mxu0
        %v511 = vpop.f32.mrb[0].mxu0
        %v512 = vadd.f32 %v355, %v511
        %v513 = vpop.f32.mrb[0].mxu0
        %514 = vmatprep.mubr.bf16.mxu0 0
        %515 = vmatmul.mubr.bf16.gmra.mrb[0].mxu0 %v395
        %v516 = vpop.f32.mrb[0].mxu0
        %v517 = vadd.f32 %v355, %v516
        %v518 = vpop.f32.mrb[0].mxu0
        %v519 = vpop.f32.mrb[0].mxu0
        %v520 = vadd.f32 %v355, %v519
        %v521 = vpop.f32.mrb[0].mxu0
        %522 = vmatprep.mubr.bf16.mxu0 0
        %523 = vmatmul.mubr.bf16.gmra.mrb[0].mxu0 %v398
        %v524 = vpop.f32.mrb[0].mxu0
        %v525 = vadd.f32 %v355, %v524
        %v526 = vpop.f32.mrb[0].mxu0
        %v527 = vpop.f32.mrb[0].mxu0
        %v528 = vadd.f32 %v355, %v527
        %v529 = vpop.f32.mrb[0].mxu0
        %530 = vmatprep.mubr.bf16.mxu0 0
        %531 = vmatmul.mubr.bf16.gmra.mrb[0].mxu0 %v401
        %v532 = vpop.f32.mrb[0].mxu0
        %v533 = vadd.f32 %v355, %v532
        %v534 = vpop.f32.mrb[0].mxu0
        %v535 = vpop.f32.mrb[0].mxu0
        %v536 = vadd.f32 %v355, %v535
        %v537 = vpop.f32.mrb[0].mxu0
        %538 = vmatprep.mubr.bf16.mxu0 0
        %539 = vmatmul.mubr.bf16.gmra.mrb[0].mxu0 %v404
        %v540 = vpop.f32.mrb[0].mxu0
        %v541 = vadd.f32 %v355, %v540
        %v542 = vpop.f32.mrb[0].mxu0
        %v543 = vpop.f32.mrb[0].mxu0
        %v544 = vadd.f32 %v355, %v543
        %v545 = vpop.f32.mrb[0].mxu0
        %546 = vmatprep.mubr.bf16.mxu0 0
        %547 = vmatmul.mubr.bf16.gmra.mrb[0].mxu0 %v407
        %v548 = vpop.f32.mrb[0].mxu0
        %v549 = vadd.f32 %v355, %v548
        %v550 = vpop.f32.mrb[0].mxu0
        %v551 = vpop.f32.mrb[0].mxu0
        %v552 = vadd.f32 %v355, %v551
        %v553 = vpop.f32.mrb[0].mxu0
        %554 = vmatprep.mubr.bf16.mxu0 0
        %555 = vmatmul.mubr.bf16.gmra.mrb[0].mxu0 %v410
        %v556 = vpop.f32.mrb[0].mxu0
        %v557 = vadd.f32 %v355, %v556
        %v558 = vpop.f32.mrb[0].mxu0
        %v559 = vpop.f32.mrb[0].mxu0
        %v560 = vadd.f32 %v355, %v559
        %v561 = vpop.f32.mrb[0].mxu0
        %562 = vmatprep.mubr.bf16.mxu0 0
        %563 = vmatmul.mubr.bf16.gmra.mrb[0].mxu0 %v413
        %v564 = vpop.f32.mrb[0].mxu0
        %v565 = vadd.f32 %v355, %v564
        %v566 = vpop.f32.mrb[0].mxu0
        %v567 = vpop.f32.mrb[0].mxu0
        %v568 = vadd.f32 %v355, %v567
        %v569 = vpop.f32.mrb[0].mxu0
        %570 = vmatprep.mubr.bf16.mxu0 0
        %571 = vmatmul.mubr.bf16.gmra.mrb[0].mxu0 %v416
        %v572 = vpop.f32.mrb[0].mxu0
        %v573 = vadd.f32 %v355, %v572
        %v574 = vpop.f32.mrb[0].mxu0
        %v575 = vpop.f32.mrb[0].mxu0
        %v576 = vadd.f32 %v355, %v575
        %v577 = vpop.f32.mrb[0].mxu0
        %578 = vdwg.mxu0
        %v579 = vmax.f32 %v453, 0.0
        %v580 = vmax.f32 %v456, 0.0
        %v581 = vmax.f32 %v461, 0.0
        %v582 = vmax.f32 %v464, 0.0
        %v583 = vmax.f32 %v469, 0.0
        %v584 = vmax.f32 %v472, 0.0
        %v585 = vmax.f32 %v477, 0.0
        %v586 = vmax.f32 %v480, 0.0
        %v587 = vmax.f32 %v485, 0.0
        %v588 = vmax.f32 %v488, 0.0
        %v589 = vmax.f32 %v493, 0.0
        %v590 = vmax.f32 %v496, 0.0
        %v591 = vmax.f32 %v501, 0.0
        %v592 = vmax.f32 %v504, 0.0
        %v593 = vmax.f32 %v509, 0.0
        %v594 = vmax.f32 %v512, 0.0
        %v595 = vmax.f32 %v517, 0.0
        %v596 = vmax.f32 %v520, 0.0
        %v597 = vmax.f32 %v525, 0.0
        %v598 = vmax.f32 %v528, 0.0
        %v599 = vmax.f32 %v533, 0.0
        %v600 = vmax.f32 %v536, 0.0
        %v601 = vmax.f32 %v541, 0.0
        %v602 = vmax.f32 %v544, 0.0
        %v603 = vmax.f32 %v549, 0.0
        %v604 = vmax.f32 %v552, 0.0
        %v605 = vmax.f32 %v557, 0.0
        %v606 = vmax.f32 %v560, 0.0
        %v607 = vmax.f32 %v565, 0.0
        %v608 = vmax.f32 %v568, 0.0
        %v609 = vmax.f32 %v573, 0.0
        %v610 = vmax.f32 %v576, 0.0
        %v611 = vmin.f32 %v579, 6.0
        %v612 = vmin.f32 %v580, 6.0
        %v613 = vmin.f32 %v581, 6.0
        %v614 = vmin.f32 %v582, 6.0
        %v615 = vmin.f32 %v583, 6.0
        %v616 = vmin.f32 %v584, 6.0
        %v617 = vmin.f32 %v585, 6.0
        %v618 = vmin.f32 %v586, 6.0
        %v619 = vmin.f32 %v587, 6.0
        %v620 = vmin.f32 %v588, 6.0
        %v621 = vmin.f32 %v589, 6.0
        %v622 = vmin.f32 %v590, 6.0
        %v623 = vmin.f32 %v591, 6.0
        %v624 = vmin.f32 %v592, 6.0
        %v625 = vmin.f32 %v593, 6.0
        %v626 = vmin.f32 %v594, 6.0
        %v627 = vmin.f32 %v595, 6.0
        %v628 = vmin.f32 %v596, 6.0
        %v629 = vmin.f32 %v597, 6.0
        %v630 = vmin.f32 %v598, 6.0
        %v631 = vmin.f32 %v599, 6.0
        %v632 = vmin.f32 %v600, 6.0
        %v633 = vmin.f32 %v601, 6.0
        %v634 = vmin.f32 %v602, 6.0
        %v635 = vmin.f32 %v603, 6.0
        %v636 = vmin.f32 %v604, 6.0
        %v637 = vmin.f32 %v605, 6.0
        %v638 = vmin.f32 %v606, 6.0
        %v639 = vmin.f32 %v607, 6.0
        %v640 = vmin.f32 %v608, 6.0
        %v641 = vmin.f32 %v609, 6.0
        %v642 = vmin.f32 %v610, 6.0
        %s643 = scalar_lea.vmem [#allocation2], 224
        %644 = vst [vmem:[%s643 + $0x7] sm:$0xff] 0.0
        %645 = vst [vmem:[%s643 + $0xf] sm:$0xff] 0.0
        %646 = vst [vmem:[%s643 + $0x17] sm:$0x3] 0.0
        %s647 = scalar_lea.vmem [#allocation2], 768
        %648 = vst [vmem:[%s647 + $0x7] sm:$0xff] 0.0
        %649 = vst [vmem:[%s647 + $0xf] sm:$0xff] 0.0
        %650 = vst [vmem:[%s647 + $0x17] sm:$0x3] 0.0
        %s651 = scalar_lea.vmem [#allocation2], 256
        %652 = vst [vmem:[%s651 + $0x7] sm:$0x1] 0.0
        %653 = vst [vmem:[%s651 + $0x27] sm:$0x1] 0.0
        %654 = vst [vmem:[%s651 + $0x47] sm:$0x1] 0.0
        %655 = vst [vmem:[%s651 + $0x67] sm:$0x1] 0.0
        %656 = vst [vmem:[%s651 + $0x87] sm:$0x1] 0.0
        %657 = vst [vmem:[%s651 + $0xa7] sm:$0x1] 0.0
        %658 = vst [vmem:[%s651 + $0xc7] sm:$0x1] 0.0
        %659 = vst [vmem:[%s651 + $0xe7] sm:$0x1] 0.0
        %660 = vst [vmem:[%s651 + $0x107] sm:$0x1] 0.0
        %661 = vst [vmem:[%s651 + $0x127] sm:$0x1] 0.0
        %662 = vst [vmem:[%s651 + $0x147] sm:$0x1] 0.0
        %663 = vst [vmem:[%s651 + $0x167] sm:$0x1] 0.0
        %664 = vst [vmem:[%s651 + $0x187] sm:$0x1] 0.0
        %665 = vst [vmem:[%s651 + $0x1a7] sm:$0x1] 0.0
        %666 = vst [vmem:[%s651 + $0x1c7] sm:$0x1] 0.0
        %667 = vst [vmem:[%s651 + $0x1e7] sm:$0x1] 0.0
        %668 = vst [vmem:[%s651 + $0x18] sm:$0x1] 0.0
        %669 = vst [vmem:[%s651 + $0x38] sm:$0x1] 0.0
        %670 = vst [vmem:[%s651 + $0x58] sm:$0x1] 0.0
        %671 = vst [vmem:[%s651 + $0x78] sm:$0x1] 0.0
        %672 = vst [vmem:[%s651 + $0x98] sm:$0x1] 0.0
        %673 = vst [vmem:[%s651 + $0xb8] sm:$0x1] 0.0
        %674 = vst [vmem:[%s651 + $0xd8] sm:$0x1] 0.0
        %675 = vst [vmem:[%s651 + $0xf8] sm:$0x1] 0.0
        %676 = vst [vmem:[%s651 + $0x118] sm:$0x1] 0.0
        %677 = vst [vmem:[%s651 + $0x138] sm:$0x1] 0.0
        %678 = vst [vmem:[%s651 + $0x158] sm:$0x1] 0.0
        %679 = vst [vmem:[%s651 + $0x178] sm:$0x1] 0.0
        %680 = vst [vmem:[%s651 + $0x198] sm:$0x1] 0.0
        %681 = vst [vmem:[%s651 + $0x1b8] sm:$0x1] 0.0
        %682 = vst [vmem:[%s651 + $0x1d8] sm:$0x1] 0.0
        %683 = vst [vmem:[%s651 + $0x1f8] sm:$0x1] 0.0
        %684 = vst [vmem:[%s651 + $0x8] sm:$0xff] %v611
        %685 = vst [vmem:[%s651 + $0x10] sm:$0xff] %v612
        %686 = vst [vmem:[%s651 + $0x28] sm:$0xff] %v613
        %687 = vst [vmem:[%s651 + $0x30] sm:$0xff] %v614
        %688 = vst [vmem:[%s651 + $0x48] sm:$0xff] %v615
        %689 = vst [vmem:[%s651 + $0x50] sm:$0xff] %v616
        %690 = vst [vmem:[%s651 + $0x68] sm:$0xff] %v617
        %691 = vst [vmem:[%s651 + $0x70] sm:$0xff] %v618
        %692 = vst [vmem:[%s651 + $0x88] sm:$0xff] %v619
        %693 = vst [vmem:[%s651 + $0x90] sm:$0xff] %v620
        %694 = vst [vmem:[%s651 + $0xa8] sm:$0xff] %v621
        %695 = vst [vmem:[%s651 + $0xb0] sm:$0xff] %v622
        %696 = vst [vmem:[%s651 + $0xc8] sm:$0xff] %v623
        %697 = vst [vmem:[%s651 + $0xd0] sm:$0xff] %v624
        %698 = vst [vmem:[%s651 + $0xe8] sm:$0xff] %v625
        %699 = vst [vmem:[%s651 + $0xf0] sm:$0xff] %v626
        %700 = vst [vmem:[%s651 + $0x108] sm:$0xff] %v627
        %701 = vst [vmem:[%s651 + $0x110] sm:$0xff] %v628
        %702 = vst [vmem:[%s651 + $0x128] sm:$0xff] %v629
        %703 = vst [vmem:[%s651 + $0x130] sm:$0xff] %v630
        %704 = vst [vmem:[%s651 + $0x148] sm:$0xff] %v631
        %705 = vst [vmem:[%s651 + $0x150] sm:$0xff] %v632
        %706 = vst [vmem:[%s651 + $0x168] sm:$0xff] %v633
        %707 = vst [vmem:[%s651 + $0x170] sm:$0xff] %v634
        %708 = vst [vmem:[%s651 + $0x188] sm:$0xff] %v635
        %709 = vst [vmem:[%s651 + $0x190] sm:$0xff] %v636
        %710 = vst [vmem:[%s651 + $0x1a8] sm:$0xff] %v637
        %711 = vst [vmem:[%s651 + $0x1b0] sm:$0xff] %v638
        %712 = vst [vmem:[%s651 + $0x1c8] sm:$0xff] %v639
        %713 = vst [vmem:[%s651 + $0x1d0] sm:$0xff] %v640
        %714 = vst [vmem:[%s651 + $0x1e8] sm:$0xff] %v641
        %715 = vst [vmem:[%s651 + $0x1f0] sm:$0xff] %v642
        %v716 = vld [vmem:[%s3] sm:$0xff]
        %v717 = vld [vmem:[%s3 + $0x8] sm:$0x1]
        %v718 = vld [vmem:[%s643 + $0x7] sm:$0xff]
        %v719 = vld [vmem:[%s643 + $0xf] sm:$0xff]
        %v720 = vld [vmem:[%s643 + $0x27] sm:$0xff]
        %v721 = vld [vmem:[%s643 + $0x2f] sm:$0xff]
        %v722 = vld [vmem:[%s643 + $0x47] sm:$0xff]
        %v723 = vld [vmem:[%s643 + $0x4f] sm:$0xff]
        %v724 = vld [vmem:[%s643 + $0x67] sm:$0xff]
        %v725 = vld [vmem:[%s643 + $0x6f] sm:$0xff]
        %v726 = vld [vmem:[%s643 + $0x87] sm:$0xff]
        %v727 = vld [vmem:[%s643 + $0x8f] sm:$0xff]
        %v728 = vld [vmem:[%s643 + $0xa7] sm:$0xff]
        %v729 = vld [vmem:[%s643 + $0xaf] sm:$0xff]
        %v730 = vld [vmem:[%s643 + $0xc7] sm:$0xff]
        %v731 = vld [vmem:[%s643 + $0xcf] sm:$0xff]
        %v732 = vld [vmem:[%s643 + $0xe7] sm:$0xff]
        %v733 = vld [vmem:[%s643 + $0xef] sm:$0xff]
        %v734 = vld [vmem:[%s643 + $0x107] sm:$0xff]
        %v735 = vld [vmem:[%s643 + $0x10f] sm:$0xff]
        %v736 = vld [vmem:[%s643 + $0x127] sm:$0xff]
        %v737 = vld [vmem:[%s643 + $0x12f] sm:$0xff]
        %v738 = vld [vmem:[%s643 + $0x147] sm:$0xff]
        %v739 = vld [vmem:[%s643 + $0x14f] sm:$0xff]
        %v740 = vld [vmem:[%s643 + $0x167] sm:$0xff]
        %v741 = vld [vmem:[%s643 + $0x16f] sm:$0xff]
        %v742 = vld [vmem:[%s643 + $0x187] sm:$0xff]
        %v743 = vld [vmem:[%s643 + $0x18f] sm:$0xff]
        %v744 = vld [vmem:[%s643 + $0x1a7] sm:$0xff]
        %v745 = vld [vmem:[%s643 + $0x1af] sm:$0xff]
        %v746 = vld [vmem:[%s643 + $0x1c7] sm:$0xff]
        %v747 = vld [vmem:[%s643 + $0x1cf] sm:$0xff]
        %v748 = vld [vmem:[%s643 + $0x1e7] sm:$0xff]
        %v749 = vld [vmem:[%s643 + $0x1ef] sm:$0xff]
        %v750 = vlaneseq
        %v751 = vshrl.u32 %v750, 7
        %v752 = vsub.s32 0, %v751
        %v753 = vrot.slane %v716, %v752
        %v754 = vmul.f32 %v718, %v753
        %v755 = vmul.f32 %v719, %v753
        %v756 = vmul.f32 %v720, %v753
        %v757 = vmul.f32 %v721, %v753
        %v758 = vmul.f32 %v722, %v753
        %v759 = vmul.f32 %v723, %v753
        %v760 = vmul.f32 %v724, %v753
        %v761 = vmul.f32 %v725, %v753
        %v762 = vmul.f32 %v726, %v753
        %v763 = vmul.f32 %v727, %v753
        %v764 = vmul.f32 %v728, %v753
        %v765 = vmul.f32 %v729, %v753
        %v766 = vmul.f32 %v730, %v753
        %v767 = vmul.f32 %v731, %v753
        %v768 = vmul.f32 %v732, %v753
        %v769 = vmul.f32 %v733, %v753
        %v770 = vmul.f32 %v734, %v753
        %v771 = vmul.f32 %v735, %v753
        %v772 = vmul.f32 %v736, %v753
        %v773 = vmul.f32 %v737, %v753
        %v774 = vmul.f32 %v738, %v753
        %v775 = vmul.f32 %v739, %v753
        %v776 = vmul.f32 %v740, %v753
        %v777 = vmul.f32 %v741, %v753
        %v778 = vmul.f32 %v742, %v753
        %v779 = vmul.f32 %v743, %v753
        %v780 = vmul.f32 %v744, %v753
        %v781 = vmul.f32 %v745, %v753
        %v782 = vmul.f32 %v746, %v753
        %v783 = vmul.f32 %v747, %v753
        %v784 = vmul.f32 %v748, %v753
        %v785 = vmul.f32 %v749, %v753
        %v786 = vadd.f32 %v754, 0.0
        %v787 = vadd.f32 %v755, 0.0
        %v788 = vadd.f32 %v756, 0.0
        %v789 = vadd.f32 %v757, 0.0
        %v790 = vadd.f32 %v758, 0.0
        %v791 = vadd.f32 %v759, 0.0
        %v792 = vadd.f32 %v760, 0.0
        %v793 = vadd.f32 %v761, 0.0
        %v794 = vadd.f32 %v762, 0.0
        %v795 = vadd.f32 %v763, 0.0
        %v796 = vadd.f32 %v764, 0.0
        %v797 = vadd.f32 %v765, 0.0
        %v798 = vadd.f32 %v766, 0.0
        %v799 = vadd.f32 %v767, 0.0
        %v800 = vadd.f32 %v768, 0.0
        %v801 = vadd.f32 %v769, 0.0
        %v802 = vadd.f32 %v770, 0.0
        %v803 = vadd.f32 %v771, 0.0
        %v804 = vadd.f32 %v772, 0.0
        %v805 = vadd.f32 %v773, 0.0
        %v806 = vadd.f32 %v774, 0.0
        %v807 = vadd.f32 %v775, 0.0
        %v808 = vadd.f32 %v776, 0.0
        %v809 = vadd.f32 %v777, 0.0
        %v810 = vadd.f32 %v778, 0.0
        %v811 = vadd.f32 %v779, 0.0
        %v812 = vadd.f32 %v780, 0.0
        %v813 = vadd.f32 %v781, 0.0
        %v814 = vadd.f32 %v782, 0.0
        %v815 = vadd.f32 %v783, 0.0
        %v816 = vadd.f32 %v784, 0.0
        %v817 = vadd.f32 %v785, 0.0
        %v818 = vld [vmem:[%s643 + $0x8] sm:$0xff]
        %v819 = vld [vmem:[%s643 + $0x10] sm:$0xff]
        %v820 = vld [vmem:[%s643 + $0x28] sm:$0xff]
        %v821 = vld [vmem:[%s643 + $0x30] sm:$0xff]
        %v822 = vld [vmem:[%s643 + $0x48] sm:$0xff]
        %v823 = vld [vmem:[%s643 + $0x50] sm:$0xff]
        %v824 = vld [vmem:[%s643 + $0x68] sm:$0xff]
        %v825 = vld [vmem:[%s643 + $0x70] sm:$0xff]
        %v826 = vld [vmem:[%s643 + $0x88] sm:$0xff]
        %v827 = vld [vmem:[%s643 + $0x90] sm:$0xff]
        %v828 = vld [vmem:[%s643 + $0xa8] sm:$0xff]
        %v829 = vld [vmem:[%s643 + $0xb0] sm:$0xff]
        %v830 = vld [vmem:[%s643 + $0xc8] sm:$0xff]
        %v831 = vld [vmem:[%s643 + $0xd0] sm:$0xff]
        %v832 = vld [vmem:[%s643 + $0xe8] sm:$0xff]
        %v833 = vld [vmem:[%s643 + $0xf0] sm:$0xff]
        %v834 = vld [vmem:[%s643 + $0x108] sm:$0xff]
        %v835 = vld [vmem:[%s643 + $0x110] sm:$0xff]
        %v836 = vld [vmem:[%s643 + $0x128] sm:$0xff]
        %v837 = vld [vmem:[%s643 + $0x130] sm:$0xff]
        %v838 = vld [vmem:[%s643 + $0x148] sm:$0xff]
        %v839 = vld [vmem:[%s643 + $0x150] sm:$0xff]
        %v840 = vld [vmem:[%s643 + $0x168] sm:$0xff]
        %v841 = vld [vmem:[%s643 + $0x170] sm:$0xff]
        %v842 = vld [vmem:[%s643 + $0x188] sm:$0xff]
        %v843 = vld [vmem:[%s643 + $0x190] sm:$0xff]
        %v844 = vld [vmem:[%s643 + $0x1a8] sm:$0xff]
        %v845 = vld [vmem:[%s643 + $0x1b0] sm:$0xff]
        %v846 = vld [vmem:[%s643 + $0x1c8] sm:$0xff]
        %v847 = vld [vmem:[%s643 + $0x1d0] sm:$0xff]
        %v848 = vld [vmem:[%s643 + $0x1e8] sm:$0xff]
        %v849 = vld [vmem:[%s643 + $0x1f0] sm:$0xff]
        %v850 = vlaneseq
        %v851 = vshrl.u32 %v850, 7
        %v852 = vsub.s32 1, %v851
        %v853 = vrot.slane %v716, %v852
        %v854 = vmul.f32 %v818, %v853
        %v855 = vmul.f32 %v819, %v853
        %v856 = vmul.f32 %v820, %v853
        %v857 = vmul.f32 %v821, %v853
        %v858 = vmul.f32 %v822, %v853
        %v859 = vmul.f32 %v823, %v853
        %v860 = vmul.f32 %v824, %v853
        %v861 = vmul.f32 %v825, %v853
        %v862 = vmul.f32 %v826, %v853
        %v863 = vmul.f32 %v827, %v853
        %v864 = vmul.f32 %v828, %v853
        %v865 = vmul.f32 %v829, %v853
        %v866 = vmul.f32 %v830, %v853
        %v867 = vmul.f32 %v831, %v853
        %v868 = vmul.f32 %v832, %v853
        %v869 = vmul.f32 %v833, %v853
        %v870 = vmul.f32 %v834, %v853
        %v871 = vmul.f32 %v835, %v853
        %v872 = vmul.f32 %v836, %v853
        %v873 = vmul.f32 %v837, %v853
        %v874 = vmul.f32 %v838, %v853
        %v875 = vmul.f32 %v839, %v853
        %v876 = vmul.f32 %v840, %v853
        %v877 = vmul.f32 %v841, %v853
        %v878 = vmul.f32 %v842, %v853
        %v879 = vmul.f32 %v843, %v853
        %v880 = vmul.f32 %v844, %v853
        %v881 = vmul.f32 %v845, %v853
        %v882 = vmul.f32 %v846, %v853
        %v883 = vmul.f32 %v847, %v853
        %v884 = vmul.f32 %v848, %v853
        %v885 = vmul.f32 %v849, %v853
        %v886 = vadd.f32 %v786, %v854
        %v887 = vadd.f32 %v787, %v855
        %v888 = vadd.f32 %v788, %v856
        %v889 = vadd.f32 %v789, %v857
        %v890 = vadd.f32 %v790, %v858
        %v891 = vadd.f32 %v791, %v859
        %v892 = vadd.f32 %v792, %v860
        %v893 = vadd.f32 %v793, %v861
        %v894 = vadd.f32 %v794, %v862
        %v895 = vadd.f32 %v795, %v863
        %v896 = vadd.f32 %v796, %v864
        %v897 = vadd.f32 %v797, %v865
        %v898 = vadd.f32 %v798, %v866
        %v899 = vadd.f32 %v799, %v867
        %v900 = vadd.f32 %v800, %v868
        %v901 = vadd.f32 %v801, %v869
        %v902 = vadd.f32 %v802, %v870
        %v903 = vadd.f32 %v803, %v871
        %v904 = vadd.f32 %v804, %v872
        %v905 = vadd.f32 %v805, %v873
        %v906 = vadd.f32 %v806, %v874
        %v907 = vadd.f32 %v807, %v875
        %v908 = vadd.f32 %v808, %v876
        %v909 = vadd.f32 %v809, %v877
        %v910 = vadd.f32 %v810, %v878
        %v911 = vadd.f32 %v811, %v879
        %v912 = vadd.f32 %v812, %v880
        %v913 = vadd.f32 %v813, %v881
        %v914 = vadd.f32 %v814, %v882
        %v915 = vadd.f32 %v815, %v883
        %v916 = vadd.f32 %v816, %v884
        %v917 = vadd.f32 %v817, %v885
        %v918 = vld [vmem:[%s643 + $0x9] sm:$0xff]
        %v919 = vld [vmem:[%s643 + $0x11] sm:$0xff]
        %v920 = vld [vmem:[%s643 + $0x29] sm:$0xff]
        %v921 = vld [vmem:[%s643 + $0x31] sm:$0xff]
        %v922 = vld [vmem:[%s643 + $0x49] sm:$0xff]
        %v923 = vld [vmem:[%s643 + $0x51] sm:$0xff]
        %v924 = vld [vmem:[%s643 + $0x69] sm:$0xff]
        %v925 = vld [vmem:[%s643 + $0x71] sm:$0xff]
        %v926 = vld [vmem:[%s643 + $0x89] sm:$0xff]
        %v927 = vld [vmem:[%s643 + $0x91] sm:$0xff]
        %v928 = vld [vmem:[%s643 + $0xa9] sm:$0xff]
        %v929 = vld [vmem:[%s643 + $0xb1] sm:$0xff]
        %v930 = vld [vmem:[%s643 + $0xc9] sm:$0xff]
        %v931 = vld [vmem:[%s643 + $0xd1] sm:$0xff]
        %v932 = vld [vmem:[%s643 + $0xe9] sm:$0xff]
        %v933 = vld [vmem:[%s643 + $0xf1] sm:$0xff]
        %v934 = vld [vmem:[%s643 + $0x109] sm:$0xff]
        %v935 = vld [vmem:[%s643 + $0x111] sm:$0xff]
        %v936 = vld [vmem:[%s643 + $0x129] sm:$0xff]
        %v937 = vld [vmem:[%s643 + $0x131] sm:$0xff]
        %v938 = vld [vmem:[%s643 + $0x149] sm:$0xff]
        %v939 = vld [vmem:[%s643 + $0x151] sm:$0xff]
        %v940 = vld [vmem:[%s643 + $0x169] sm:$0xff]
        %v941 = vld [vmem:[%s643 + $0x171] sm:$0xff]
        %v942 = vld [vmem:[%s643 + $0x189] sm:$0xff]
        %v943 = vld [vmem:[%s643 + $0x191] sm:$0xff]
        %v944 = vld [vmem:[%s643 + $0x1a9] sm:$0xff]
        %v945 = vld [vmem:[%s643 + $0x1b1] sm:$0xff]
        %v946 = vld [vmem:[%s643 + $0x1c9] sm:$0xff]
        %v947 = vld [vmem:[%s643 + $0x1d1] sm:$0xff]
        %v948 = vld [vmem:[%s643 + $0x1e9] sm:$0xff]
        %v949 = vld [vmem:[%s643 + $0x1f1] sm:$0xff]
        %v950 = vlaneseq
        %v951 = vshrl.u32 %v950, 7
        %v952 = vsub.s32 2, %v951
        %v953 = vrot.slane %v716, %v952
        %v954 = vmul.f32 %v918, %v953
        %v955 = vmul.f32 %v919, %v953
        %v956 = vmul.f32 %v920, %v953
        %v957 = vmul.f32 %v921, %v953
        %v958 = vmul.f32 %v922, %v953
        %v959 = vmul.f32 %v923, %v953
        %v960 = vmul.f32 %v924, %v953
        %v961 = vmul.f32 %v925, %v953
        %v962 = vmul.f32 %v926, %v953
        %v963 = vmul.f32 %v927, %v953
        %v964 = vmul.f32 %v928, %v953
        %v965 = vmul.f32 %v929, %v953
        %v966 = vmul.f32 %v930, %v953
        %v967 = vmul.f32 %v931, %v953
        %v968 = vmul.f32 %v932, %v953
        %v969 = vmul.f32 %v933, %v953
        %v970 = vmul.f32 %v934, %v953
        %v971 = vmul.f32 %v935, %v953
        %v972 = vmul.f32 %v936, %v953
        %v973 = vmul.f32 %v937, %v953
        %v974 = vmul.f32 %v938, %v953
        %v975 = vmul.f32 %v939, %v953
        %v976 = vmul.f32 %v940, %v953
        %v977 = vmul.f32 %v941, %v953
        %v978 = vmul.f32 %v942, %v953
        %v979 = vmul.f32 %v943, %v953
        %v980 = vmul.f32 %v944, %v953
        %v981 = vmul.f32 %v945, %v953
        %v982 = vmul.f32 %v946, %v953
        %v983 = vmul.f32 %v947, %v953
        %v984 = vmul.f32 %v948, %v953
        %v985 = vmul.f32 %v949, %v953
        %v986 = vadd.f32 %v886, %v954
        %v987 = vadd.f32 %v887, %v955
        %v988 = vadd.f32 %v888, %v956
        %v989 = vadd.f32 %v889, %v957
        %v990 = vadd.f32 %v890, %v958
        %v991 = vadd.f32 %v891, %v959
        %v992 = vadd.f32 %v892, %v960
        %v993 = vadd.f32 %v893, %v961
        %v994 = vadd.f32 %v894, %v962
        %v995 = vadd.f32 %v895, %v963
        %v996 = vadd.f32 %v896, %v964
        %v997 = vadd.f32 %v897, %v965
        %v998 = vadd.f32 %v898, %v966
        %v999 = vadd.f32 %v899, %v967
        %v1000 = vadd.f32 %v900, %v968
        %v1001 = vadd.f32 %v901, %v969
        %v1002 = vadd.f32 %v902, %v970
        %v1003 = vadd.f32 %v903, %v971
        %v1004 = vadd.f32 %v904, %v972
        %v1005 = vadd.f32 %v905, %v973
        %v1006 = vadd.f32 %v906, %v974
        %v1007 = vadd.f32 %v907, %v975
        %v1008 = vadd.f32 %v908, %v976
        %v1009 = vadd.f32 %v909, %v977
        %v1010 = vadd.f32 %v910, %v978
        %v1011 = vadd.f32 %v911, %v979
        %v1012 = vadd.f32 %v912, %v980
        %v1013 = vadd.f32 %v913, %v981
        %v1014 = vadd.f32 %v914, %v982
        %v1015 = vadd.f32 %v915, %v983
        %v1016 = vadd.f32 %v916, %v984
        %v1017 = vadd.f32 %v917, %v985
        %v1018 = vld [vmem:[%s651 + $0x7] sm:$0xff]
        %v1019 = vld [vmem:[%s651 + $0xf] sm:$0xff]
        %v1020 = vld [vmem:[%s651 + $0x27] sm:$0xff]
        %v1021 = vld [vmem:[%s651 + $0x2f] sm:$0xff]
        %v1022 = vld [vmem:[%s651 + $0x47] sm:$0xff]
        %v1023 = vld [vmem:[%s651 + $0x4f] sm:$0xff]
        %v1024 = vld [vmem:[%s651 + $0x67] sm:$0xff]
        %v1025 = vld [vmem:[%s651 + $0x6f] sm:$0xff]
        %v1026 = vld [vmem:[%s651 + $0x87] sm:$0xff]
        %v1027 = vld [vmem:[%s651 + $0x8f] sm:$0xff]
        %v1028 = vld [vmem:[%s651 + $0xa7] sm:$0xff]
        %v1029 = vld [vmem:[%s651 + $0xaf] sm:$0xff]
        %v1030 = vld [vmem:[%s651 + $0xc7] sm:$0xff]
        %v1031 = vld [vmem:[%s651 + $0xcf] sm:$0xff]
        %v1032 = vld [vmem:[%s651 + $0xe7] sm:$0xff]
        %v1033 = vld [vmem:[%s651 + $0xef] sm:$0xff]
        %v1034 = vld [vmem:[%s651 + $0x107] sm:$0xff]
        %v1035 = vld [vmem:[%s651 + $0x10f] sm:$0xff]
        %v1036 = vld [vmem:[%s651 + $0x127] sm:$0xff]
        %v1037 = vld [vmem:[%s651 + $0x12f] sm:$0xff]
        %v1038 = vld [vmem:[%s651 + $0x147] sm:$0xff]
        %v1039 = vld [vmem:[%s651 + $0x14f] sm:$0xff]
        %v1040 = vld [vmem:[%s651 + $0x167] sm:$0xff]
        %v1041 = vld [vmem:[%s651 + $0x16f] sm:$0xff]
        %v1042 = vld [vmem:[%s651 + $0x187] sm:$0xff]
        %v1043 = vld [vmem:[%s651 + $0x18f] sm:$0xff]
        %v1044 = vld [vmem:[%s651 + $0x1a7] sm:$0xff]
        %v1045 = vld [vmem:[%s651 + $0x1af] sm:$0xff]
        %v1046 = vld [vmem:[%s651 + $0x1c7] sm:$0xff]
        %v1047 = vld [vmem:[%s651 + $0x1cf] sm:$0xff]
        %v1048 = vld [vmem:[%s651 + $0x1e7] sm:$0xff]
        %v1049 = vld [vmem:[%s651 + $0x1ef] sm:$0xff]
        %v1050 = vlaneseq
        %v1051 = vshrl.u32 %v1050, 7
        %v1052 = vsub.s32 3, %v1051
        %v1053 = vrot.slane %v716, %v1052
        %v1054 = vmul.f32 %v1018, %v1053
        %v1055 = vmul.f32 %v1019, %v1053
        %v1056 = vmul.f32 %v1020, %v1053
        %v1057 = vmul.f32 %v1021, %v1053
        %v1058 = vmul.f32 %v1022, %v1053
        %v1059 = vmul.f32 %v1023, %v1053
        %v1060 = vmul.f32 %v1024, %v1053
        %v1061 = vmul.f32 %v1025, %v1053
        %v1062 = vmul.f32 %v1026, %v1053
        %v1063 = vmul.f32 %v1027, %v1053
        %v1064 = vmul.f32 %v1028, %v1053
        %v1065 = vmul.f32 %v1029, %v1053
        %v1066 = vmul.f32 %v1030, %v1053
        %v1067 = vmul.f32 %v1031, %v1053
        %v1068 = vmul.f32 %v1032, %v1053
        %v1069 = vmul.f32 %v1033, %v1053
        %v1070 = vmul.f32 %v1034, %v1053
        %v1071 = vmul.f32 %v1035, %v1053
        %v1072 = vmul.f32 %v1036, %v1053
        %v1073 = vmul.f32 %v1037, %v1053
        %v1074 = vmul.f32 %v1038, %v1053
        %v1075 = vmul.f32 %v1039, %v1053
        %v1076 = vmul.f32 %v1040, %v1053
        %v1077 = vmul.f32 %v1041, %v1053
        %v1078 = vmul.f32 %v1042, %v1053
        %v1079 = vmul.f32 %v1043, %v1053
        %v1080 = vmul.f32 %v1044, %v1053
        %v1081 = vmul.f32 %v1045, %v1053
        %v1082 = vmul.f32 %v1046, %v1053
        %v1083 = vmul.f32 %v1047, %v1053
        %v1084 = vmul.f32 %v1048, %v1053
        %v1085 = vmul.f32 %v1049, %v1053
        %v1086 = vadd.f32 %v986, %v1054
        %v1087 = vadd.f32 %v987, %v1055
        %v1088 = vadd.f32 %v988, %v1056
        %v1089 = vadd.f32 %v989, %v1057
        %v1090 = vadd.f32 %v990, %v1058
        %v1091 = vadd.f32 %v991, %v1059
        %v1092 = vadd.f32 %v992, %v1060
        %v1093 = vadd.f32 %v993, %v1061
        %v1094 = vadd.f32 %v994, %v1062
        %v1095 = vadd.f32 %v995, %v1063
        %v1096 = vadd.f32 %v996, %v1064
        %v1097 = vadd.f32 %v997, %v1065
        %v1098 = vadd.f32 %v998, %v1066
        %v1099 = vadd.f32 %v999, %v1067
        %v1100 = vadd.f32 %v1000, %v1068
        %v1101 = vadd.f32 %v1001, %v1069
        %v1102 = vadd.f32 %v1002, %v1070
        %v1103 = vadd.f32 %v1003, %v1071
        %v1104 = vadd.f32 %v1004, %v1072
        %v1105 = vadd.f32 %v1005, %v1073
        %v1106 = vadd.f32 %v1006, %v1074
        %v1107 = vadd.f32 %v1007, %v1075
        %v1108 = vadd.f32 %v1008, %v1076
        %v1109 = vadd.f32 %v1009, %v1077
        %v1110 = vadd.f32 %v1010, %v1078
        %v1111 = vadd.f32 %v1011, %v1079
        %v1112 = vadd.f32 %v1012, %v1080
        %v1113 = vadd.f32 %v1013, %v1081
        %v1114 = vadd.f32 %v1014, %v1082
        %v1115 = vadd.f32 %v1015, %v1083
        %v1116 = vadd.f32 %v1016, %v1084
        %v1117 = vadd.f32 %v1017, %v1085
        %v1118 = vld [vmem:[%s651 + $0x8] sm:$0xff]
        %v1119 = vld [vmem:[%s651 + $0x10] sm:$0xff]
        %v1120 = vld [vmem:[%s651 + $0x28] sm:$0xff]
        %v1121 = vld [vmem:[%s651 + $0x30] sm:$0xff]
        %v1122 = vld [vmem:[%s651 + $0x48] sm:$0xff]
        %v1123 = vld [vmem:[%s651 + $0x50] sm:$0xff]
        %v1124 = vld [vmem:[%s651 + $0x68] sm:$0xff]
        %v1125 = vld [vmem:[%s651 + $0x70] sm:$0xff]
        %v1126 = vld [vmem:[%s651 + $0x88] sm:$0xff]
        %v1127 = vld [vmem:[%s651 + $0x90] sm:$0xff]
        %v1128 = vld [vmem:[%s651 + $0xa8] sm:$0xff]
        %v1129 = vld [vmem:[%s651 + $0xb0] sm:$0xff]
        %v1130 = vld [vmem:[%s651 + $0xc8] sm:$0xff]
        %v1131 = vld [vmem:[%s651 + $0xd0] sm:$0xff]
        %v1132 = vld [vmem:[%s651 + $0xe8] sm:$0xff]
        %v1133 = vld [vmem:[%s651 + $0xf0] sm:$0xff]
        %v1134 = vld [vmem:[%s651 + $0x108] sm:$0xff]
        %v1135 = vld [vmem:[%s651 + $0x110] sm:$0xff]
        %v1136 = vld [vmem:[%s651 + $0x128] sm:$0xff]
        %v1137 = vld [vmem:[%s651 + $0x130] sm:$0xff]
        %v1138 = vld [vmem:[%s651 + $0x148] sm:$0xff]
        %v1139 = vld [vmem:[%s651 + $0x150] sm:$0xff]
        %v1140 = vld [vmem:[%s651 + $0x168] sm:$0xff]
        %v1141 = vld [vmem:[%s651 + $0x170] sm:$0xff]
        %v1142 = vld [vmem:[%s651 + $0x188] sm:$0xff]
        %v1143 = vld [vmem:[%s651 + $0x190] sm:$0xff]
        %v1144 = vld [vmem:[%s651 + $0x1a8] sm:$0xff]
        %v1145 = vld [vmem:[%s651 + $0x1b0] sm:$0xff]
        %v1146 = vld [vmem:[%s651 + $0x1c8] sm:$0xff]
        %v1147 = vld [vmem:[%s651 + $0x1d0] sm:$0xff]
        %v1148 = vld [vmem:[%s651 + $0x1e8] sm:$0xff]
        %v1149 = vld [vmem:[%s651 + $0x1f0] sm:$0xff]
        %v1150 = vlaneseq
        %v1151 = vshrl.u32 %v1150, 7
        %v1152 = vsub.s32 4, %v1151
        %v1153 = vrot.slane %v716, %v1152
        %v1154 = vmul.f32 %v1118, %v1153
        %v1155 = vmul.f32 %v1119, %v1153
        %v1156 = vmul.f32 %v1120, %v1153
        %v1157 = vmul.f32 %v1121, %v1153
        %v1158 = vmul.f32 %v1122, %v1153
        %v1159 = vmul.f32 %v1123, %v1153
        %v1160 = vmul.f32 %v1124, %v1153
        %v1161 = vmul.f32 %v1125, %v1153
        %v1162 = vmul.f32 %v1126, %v1153
        %v1163 = vmul.f32 %v1127, %v1153
        %v1164 = vmul.f32 %v1128, %v1153
        %v1165 = vmul.f32 %v1129, %v1153
        %v1166 = vmul.f32 %v1130, %v1153
        %v1167 = vmul.f32 %v1131, %v1153
        %v1168 = vmul.f32 %v1132, %v1153
        %v1169 = vmul.f32 %v1133, %v1153
        %v1170 = vmul.f32 %v1134, %v1153
        %v1171 = vmul.f32 %v1135, %v1153
        %v1172 = vmul.f32 %v1136, %v1153
        %v1173 = vmul.f32 %v1137, %v1153
        %v1174 = vmul.f32 %v1138, %v1153
        %v1175 = vmul.f32 %v1139, %v1153
        %v1176 = vmul.f32 %v1140, %v1153
        %v1177 = vmul.f32 %v1141, %v1153
        %v1178 = vmul.f32 %v1142, %v1153
        %v1179 = vmul.f32 %v1143, %v1153
        %v1180 = vmul.f32 %v1144, %v1153
        %v1181 = vmul.f32 %v1145, %v1153
        %v1182 = vmul.f32 %v1146, %v1153
        %v1183 = vmul.f32 %v1147, %v1153
        %v1184 = vmul.f32 %v1148, %v1153
        %v1185 = vmul.f32 %v1149, %v1153
        %v1186 = vadd.f32 %v1086, %v1154
        %v1187 = vadd.f32 %v1087, %v1155
        %v1188 = vadd.f32 %v1088, %v1156
        %v1189 = vadd.f32 %v1089, %v1157
        %v1190 = vadd.f32 %v1090, %v1158
        %v1191 = vadd.f32 %v1091, %v1159
        %v1192 = vadd.f32 %v1092, %v1160
        %v1193 = vadd.f32 %v1093, %v1161
        %v1194 = vadd.f32 %v1094, %v1162
        %v1195 = vadd.f32 %v1095, %v1163
        %v1196 = vadd.f32 %v1096, %v1164
        %v1197 = vadd.f32 %v1097, %v1165
        %v1198 = vadd.f32 %v1098, %v1166
        %v1199 = vadd.f32 %v1099, %v1167
        %v1200 = vadd.f32 %v1100, %v1168
        %v1201 = vadd.f32 %v1101, %v1169
        %v1202 = vadd.f32 %v1102, %v1170
        %v1203 = vadd.f32 %v1103, %v1171
        %v1204 = vadd.f32 %v1104, %v1172
        %v1205 = vadd.f32 %v1105, %v1173
        %v1206 = vadd.f32 %v1106, %v1174
        %v1207 = vadd.f32 %v1107, %v1175
        %v1208 = vadd.f32 %v1108, %v1176
        %v1209 = vadd.f32 %v1109, %v1177
        %v1210 = vadd.f32 %v1110, %v1178
        %v1211 = vadd.f32 %v1111, %v1179
        %v1212 = vadd.f32 %v1112, %v1180
        %v1213 = vadd.f32 %v1113, %v1181
        %v1214 = vadd.f32 %v1114, %v1182
        %v1215 = vadd.f32 %v1115, %v1183
        %v1216 = vadd.f32 %v1116, %v1184
        %v1217 = vadd.f32 %v1117, %v1185
        %v1218 = vld [vmem:[%s651 + $0x9] sm:$0xff]
        %v1219 = vld [vmem:[%s651 + $0x11] sm:$0xff]
        %v1220 = vld [vmem:[%s651 + $0x29] sm:$0xff]
        %v1221 = vld [vmem:[%s651 + $0x31] sm:$0xff]
        %v1222 = vld [vmem:[%s651 + $0x49] sm:$0xff]
        %v1223 = vld [vmem:[%s651 + $0x51] sm:$0xff]
        %v1224 = vld [vmem:[%s651 + $0x69] sm:$0xff]
        %v1225 = vld [vmem:[%s651 + $0x71] sm:$0xff]
        %v1226 = vld [vmem:[%s651 + $0x89] sm:$0xff]
        %v1227 = vld [vmem:[%s651 + $0x91] sm:$0xff]
        %v1228 = vld [vmem:[%s651 + $0xa9] sm:$0xff]
        %v1229 = vld [vmem:[%s651 + $0xb1] sm:$0xff]
        %v1230 = vld [vmem:[%s651 + $0xc9] sm:$0xff]
        %v1231 = vld [vmem:[%s651 + $0xd1] sm:$0xff]
        %v1232 = vld [vmem:[%s651 + $0xe9] sm:$0xff]
        %v1233 = vld [vmem:[%s651 + $0xf1] sm:$0xff]
        %v1234 = vld [vmem:[%s651 + $0x109] sm:$0xff]
        %v1235 = vld [vmem:[%s651 + $0x111] sm:$0xff]
        %v1236 = vld [vmem:[%s651 + $0x129] sm:$0xff]
        %v1237 = vld [vmem:[%s651 + $0x131] sm:$0xff]
        %v1238 = vld [vmem:[%s651 + $0x149] sm:$0xff]
        %v1239 = vld [vmem:[%s651 + $0x151] sm:$0xff]
        %v1240 = vld [vmem:[%s651 + $0x169] sm:$0xff]
        %v1241 = vld [vmem:[%s651 + $0x171] sm:$0xff]
        %v1242 = vld [vmem:[%s651 + $0x189] sm:$0xff]
        %v1243 = vld [vmem:[%s651 + $0x191] sm:$0xff]
        %v1244 = vld [vmem:[%s651 + $0x1a9] sm:$0xff]
        %v1245 = vld [vmem:[%s651 + $0x1b1] sm:$0xff]
        %v1246 = vld [vmem:[%s651 + $0x1c9] sm:$0xff]
        %v1247 = vld [vmem:[%s651 + $0x1d1] sm:$0xff]
        %v1248 = vld [vmem:[%s651 + $0x1e9] sm:$0xff]
        %v1249 = vld [vmem:[%s651 + $0x1f1] sm:$0xff]
        %v1250 = vlaneseq
        %v1251 = vshrl.u32 %v1250, 7
        %v1252 = vsub.s32 5, %v1251
        %v1253 = vrot.slane %v716, %v1252
        %v1254 = vmul.f32 %v1218, %v1253
        %v1255 = vmul.f32 %v1219, %v1253
        %v1256 = vmul.f32 %v1220, %v1253
        %v1257 = vmul.f32 %v1221, %v1253
        %v1258 = vmul.f32 %v1222, %v1253
        %v1259 = vmul.f32 %v1223, %v1253
        %v1260 = vmul.f32 %v1224, %v1253
        %v1261 = vmul.f32 %v1225, %v1253
        %v1262 = vmul.f32 %v1226, %v1253
        %v1263 = vmul.f32 %v1227, %v1253
        %v1264 = vmul.f32 %v1228, %v1253
        %v1265 = vmul.f32 %v1229, %v1253
        %v1266 = vmul.f32 %v1230, %v1253
        %v1267 = vmul.f32 %v1231, %v1253
        %v1268 = vmul.f32 %v1232, %v1253
        %v1269 = vmul.f32 %v1233, %v1253
        %v1270 = vmul.f32 %v1234, %v1253
        %v1271 = vmul.f32 %v1235, %v1253
        %v1272 = vmul.f32 %v1236, %v1253
        %v1273 = vmul.f32 %v1237, %v1253
        %v1274 = vmul.f32 %v1238, %v1253
        %v1275 = vmul.f32 %v1239, %v1253
        %v1276 = vmul.f32 %v1240, %v1253
        %v1277 = vmul.f32 %v1241, %v1253
        %v1278 = vmul.f32 %v1242, %v1253
        %v1279 = vmul.f32 %v1243, %v1253
        %v1280 = vmul.f32 %v1244, %v1253
        %v1281 = vmul.f32 %v1245, %v1253
        %v1282 = vmul.f32 %v1246, %v1253
        %v1283 = vmul.f32 %v1247, %v1253
        %v1284 = vmul.f32 %v1248, %v1253
        %v1285 = vmul.f32 %v1249, %v1253
        %v1286 = vadd.f32 %v1186, %v1254
        %v1287 = vadd.f32 %v1187, %v1255
        %v1288 = vadd.f32 %v1188, %v1256
        %v1289 = vadd.f32 %v1189, %v1257
        %v1290 = vadd.f32 %v1190, %v1258
        %v1291 = vadd.f32 %v1191, %v1259
        %v1292 = vadd.f32 %v1192, %v1260
        %v1293 = vadd.f32 %v1193, %v1261
        %v1294 = vadd.f32 %v1194, %v1262
        %v1295 = vadd.f32 %v1195, %v1263
        %v1296 = vadd.f32 %v1196, %v1264
        %v1297 = vadd.f32 %v1197, %v1265
        %v1298 = vadd.f32 %v1198, %v1266
        %v1299 = vadd.f32 %v1199, %v1267
        %v1300 = vadd.f32 %v1200, %v1268
        %v1301 = vadd.f32 %v1201, %v1269
        %v1302 = vadd.f32 %v1202, %v1270
        %v1303 = vadd.f32 %v1203, %v1271
        %v1304 = vadd.f32 %v1204, %v1272
        %v1305 = vadd.f32 %v1205, %v1273
        %v1306 = vadd.f32 %v1206, %v1274
        %v1307 = vadd.f32 %v1207, %v1275
        %v1308 = vadd.f32 %v1208, %v1276
        %v1309 = vadd.f32 %v1209, %v1277
        %v1310 = vadd.f32 %v1210, %v1278
        %v1311 = vadd.f32 %v1211, %v1279
        %v1312 = vadd.f32 %v1212, %v1280
        %v1313 = vadd.f32 %v1213, %v1281
        %v1314 = vadd.f32 %v1214, %v1282
        %v1315 = vadd.f32 %v1215, %v1283
        %v1316 = vadd.f32 %v1216, %v1284
        %v1317 = vadd.f32 %v1217, %v1285
        %s1318 = scalar_lea.vmem [#allocation2], 288
        %v1319 = vld [vmem:[%s1318 + $0x7] sm:$0xff]
        %v1320 = vld [vmem:[%s1318 + $0xf] sm:$0xff]
        %v1321 = vld [vmem:[%s1318 + $0x27] sm:$0xff]
        %v1322 = vld [vmem:[%s1318 + $0x2f] sm:$0xff]
        %v1323 = vld [vmem:[%s1318 + $0x47] sm:$0xff]
        %v1324 = vld [vmem:[%s1318 + $0x4f] sm:$0xff]
        %v1325 = vld [vmem:[%s1318 + $0x67] sm:$0xff]
        %v1326 = vld [vmem:[%s1318 + $0x6f] sm:$0xff]
        %v1327 = vld [vmem:[%s1318 + $0x87] sm:$0xff]
        %v1328 = vld [vmem:[%s1318 + $0x8f] sm:$0xff]
        %v1329 = vld [vmem:[%s1318 + $0xa7] sm:$0xff]
        %v1330 = vld [vmem:[%s1318 + $0xaf] sm:$0xff]
        %v1331 = vld [vmem:[%s1318 + $0xc7] sm:$0xff]
        %v1332 = vld [vmem:[%s1318 + $0xcf] sm:$0xff]
        %v1333 = vld [vmem:[%s1318 + $0xe7] sm:$0xff]
        %v1334 = vld [vmem:[%s1318 + $0xef] sm:$0xff]
        %v1335 = vld [vmem:[%s1318 + $0x107] sm:$0xff]
        %v1336 = vld [vmem:[%s1318 + $0x10f] sm:$0xff]
        %v1337 = vld [vmem:[%s1318 + $0x127] sm:$0xff]
        %v1338 = vld [vmem:[%s1318 + $0x12f] sm:$0xff]
        %v1339 = vld [vmem:[%s1318 + $0x147] sm:$0xff]
        %v1340 = vld [vmem:[%s1318 + $0x14f] sm:$0xff]
        %v1341 = vld [vmem:[%s1318 + $0x167] sm:$0xff]
        %v1342 = vld [vmem:[%s1318 + $0x16f] sm:$0xff]
        %v1343 = vld [vmem:[%s1318 + $0x187] sm:$0xff]
        %v1344 = vld [vmem:[%s1318 + $0x18f] sm:$0xff]
        %v1345 = vld [vmem:[%s1318 + $0x1a7] sm:$0xff]
        %v1346 = vld [vmem:[%s1318 + $0x1af] sm:$0xff]
        %v1347 = vld [vmem:[%s1318 + $0x1c7] sm:$0xff]
        %v1348 = vld [vmem:[%s1318 + $0x1cf] sm:$0xff]
        %v1349 = vld [vmem:[%s1318 + $0x1e7] sm:$0xff]
        %v1350 = vld [vmem:[%s1318 + $0x1ef] sm:$0xff]
        %v1351 = vlaneseq
        %v1352 = vshrl.u32 %v1351, 7
        %v1353 = vsub.s32 6, %v1352
        %v1354 = vrot.slane %v716, %v1353
        %v1355 = vmul.f32 %v1319, %v1354
        %v1356 = vmul.f32 %v1320, %v1354
        %v1357 = vmul.f32 %v1321, %v1354
        %v1358 = vmul.f32 %v1322, %v1354
        %v1359 = vmul.f32 %v1323, %v1354
        %v1360 = vmul.f32 %v1324, %v1354
        %v1361 = vmul.f32 %v1325, %v1354
        %v1362 = vmul.f32 %v1326, %v1354
        %v1363 = vmul.f32 %v1327, %v1354
        %v1364 = vmul.f32 %v1328, %v1354
        %v1365 = vmul.f32 %v1329, %v1354
        %v1366 = vmul.f32 %v1330, %v1354
        %v1367 = vmul.f32 %v1331, %v1354
        %v1368 = vmul.f32 %v1332, %v1354
        %v1369 = vmul.f32 %v1333, %v1354
        %v1370 = vmul.f32 %v1334, %v1354
        %v1371 = vmul.f32 %v1335, %v1354
        %v1372 = vmul.f32 %v1336, %v1354
        %v1373 = vmul.f32 %v1337, %v1354
        %v1374 = vmul.f32 %v1338, %v1354
        %v1375 = vmul.f32 %v1339, %v1354
        %v1376 = vmul.f32 %v1340, %v1354
        %v1377 = vmul.f32 %v1341, %v1354
        %v1378 = vmul.f32 %v1342, %v1354
        %v1379 = vmul.f32 %v1343, %v1354
        %v1380 = vmul.f32 %v1344, %v1354
        %v1381 = vmul.f32 %v1345, %v1354
        %v1382 = vmul.f32 %v1346, %v1354
        %v1383 = vmul.f32 %v1347, %v1354
        %v1384 = vmul.f32 %v1348, %v1354
        %v1385 = vmul.f32 %v1349, %v1354
        %v1386 = vmul.f32 %v1350, %v1354
        %v1387 = vadd.f32 %v1286, %v1355
        %v1388 = vadd.f32 %v1287, %v1356
        %v1389 = vadd.f32 %v1288, %v1357
        %v1390 = vadd.f32 %v1289, %v1358
        %v1391 = vadd.f32 %v1290, %v1359
        %v1392 = vadd.f32 %v1291, %v1360
        %v1393 = vadd.f32 %v1292, %v1361
        %v1394 = vadd.f32 %v1293, %v1362
        %v1395 = vadd.f32 %v1294, %v1363
        %v1396 = vadd.f32 %v1295, %v1364
        %v1397 = vadd.f32 %v1296, %v1365
        %v1398 = vadd.f32 %v1297, %v1366
        %v1399 = vadd.f32 %v1298, %v1367
        %v1400 = vadd.f32 %v1299, %v1368
        %v1401 = vadd.f32 %v1300, %v1369
        %v1402 = vadd.f32 %v1301, %v1370
        %v1403 = vadd.f32 %v1302, %v1371
        %v1404 = vadd.f32 %v1303, %v1372
        %v1405 = vadd.f32 %v1304, %v1373
        %v1406 = vadd.f32 %v1305, %v1374
        %v1407 = vadd.f32 %v1306, %v1375
        %v1408 = vadd.f32 %v1307, %v1376
        %v1409 = vadd.f32 %v1308, %v1377
        %v1410 = vadd.f32 %v1309, %v1378
        %v1411 = vadd.f32 %v1310, %v1379
        %v1412 = vadd.f32 %v1311, %v1380
        %v1413 = vadd.f32 %v1312, %v1381
        %v1414 = vadd.f32 %v1313, %v1382
        %v1415 = vadd.f32 %v1314, %v1383
        %v1416 = vadd.f32 %v1315, %v1384
        %v1417 = vadd.f32 %v1316, %v1385
        %v1418 = vadd.f32 %v1317, %v1386
        %v1419 = vld [vmem:[%s1318 + $0x8] sm:$0xff]
        %v1420 = vld [vmem:[%s1318 + $0x10] sm:$0xff]
        %v1421 = vld [vmem:[%s1318 + $0x28] sm:$0xff]
        %v1422 = vld [vmem:[%s1318 + $0x30] sm:$0xff]
        %v1423 = vld [vmem:[%s1318 + $0x48] sm:$0xff]
        %v1424 = vld [vmem:[%s1318 + $0x50] sm:$0xff]
        %v1425 = vld [vmem:[%s1318 + $0x68] sm:$0xff]
        %v1426 = vld [vmem:[%s1318 + $0x70] sm:$0xff]
        %v1427 = vld [vmem:[%s1318 + $0x88] sm:$0xff]
        %v1428 = vld [vmem:[%s1318 + $0x90] sm:$0xff]
        %v1429 = vld [vmem:[%s1318 + $0xa8] sm:$0xff]
        %v1430 = vld [vmem:[%s1318 + $0xb0] sm:$0xff]
        %v1431 = vld [vmem:[%s1318 + $0xc8] sm:$0xff]
        %v1432 = vld [vmem:[%s1318 + $0xd0] sm:$0xff]
        %v1433 = vld [vmem:[%s1318 + $0xe8] sm:$0xff]
        %v1434 = vld [vmem:[%s1318 + $0xf0] sm:$0xff]
        %v1435 = vld [vmem:[%s1318 + $0x108] sm:$0xff]
        %v1436 = vld [vmem:[%s1318 + $0x110] sm:$0xff]
        %v1437 = vld [vmem:[%s1318 + $0x128] sm:$0xff]
        %v1438 = vld [vmem:[%s1318 + $0x130] sm:$0xff]
        %v1439 = vld [vmem:[%s1318 + $0x148] sm:$0xff]
        %v1440 = vld [vmem:[%s1318 + $0x150] sm:$0xff]
        %v1441 = vld [vmem:[%s1318 + $0x168] sm:$0xff]
        %v1442 = vld [vmem:[%s1318 + $0x170] sm:$0xff]
        %v1443 = vld [vmem:[%s1318 + $0x188] sm:$0xff]
        %v1444 = vld [vmem:[%s1318 + $0x190] sm:$0xff]
        %v1445 = vld [vmem:[%s1318 + $0x1a8] sm:$0xff]
        %v1446 = vld [vmem:[%s1318 + $0x1b0] sm:$0xff]
        %v1447 = vld [vmem:[%s1318 + $0x1c8] sm:$0xff]
        %v1448 = vld [vmem:[%s1318 + $0x1d0] sm:$0xff]
        %v1449 = vld [vmem:[%s1318 + $0x1e8] sm:$0xff]
        %v1450 = vld [vmem:[%s1318 + $0x1f0] sm:$0xff]
        %v1451 = vlaneseq
        %v1452 = vshrl.u32 %v1451, 7
        %v1453 = vsub.s32 7, %v1452
        %v1454 = vrot.slane %v716, %v1453
        %v1455 = vmul.f32 %v1419, %v1454
        %v1456 = vmul.f32 %v1420, %v1454
        %v1457 = vmul.f32 %v1421, %v1454
        %v1458 = vmul.f32 %v1422, %v1454
        %v1459 = vmul.f32 %v1423, %v1454
        %v1460 = vmul.f32 %v1424, %v1454
        %v1461 = vmul.f32 %v1425, %v1454
        %v1462 = vmul.f32 %v1426, %v1454
        %v1463 = vmul.f32 %v1427, %v1454
        %v1464 = vmul.f32 %v1428, %v1454
        %v1465 = vmul.f32 %v1429, %v1454
        %v1466 = vmul.f32 %v1430, %v1454
        %v1467 = vmul.f32 %v1431, %v1454
        %v1468 = vmul.f32 %v1432, %v1454
        %v1469 = vmul.f32 %v1433, %v1454
        %v1470 = vmul.f32 %v1434, %v1454
        %v1471 = vmul.f32 %v1435, %v1454
        %v1472 = vmul.f32 %v1436, %v1454
        %v1473 = vmul.f32 %v1437, %v1454
        %v1474 = vmul.f32 %v1438, %v1454
        %v1475 = vmul.f32 %v1439, %v1454
        %v1476 = vmul.f32 %v1440, %v1454
        %v1477 = vmul.f32 %v1441, %v1454
        %v1478 = vmul.f32 %v1442, %v1454
        %v1479 = vmul.f32 %v1443, %v1454
        %v1480 = vmul.f32 %v1444, %v1454
        %v1481 = vmul.f32 %v1445, %v1454
        %v1482 = vmul.f32 %v1446, %v1454
        %v1483 = vmul.f32 %v1447, %v1454
        %v1484 = vmul.f32 %v1448, %v1454
        %v1485 = vmul.f32 %v1449, %v1454
        %v1486 = vmul.f32 %v1450, %v1454
        %v1487 = vadd.f32 %v1387, %v1455
        %v1488 = vadd.f32 %v1388, %v1456
        %v1489 = vadd.f32 %v1389, %v1457
        %v1490 = vadd.f32 %v1390, %v1458
        %v1491 = vadd.f32 %v1391, %v1459
        %v1492 = vadd.f32 %v1392, %v1460
        %v1493 = vadd.f32 %v1393, %v1461
        %v1494 = vadd.f32 %v1394, %v1462
        %v1495 = vadd.f32 %v1395, %v1463
        %v1496 = vadd.f32 %v1396, %v1464
        %v1497 = vadd.f32 %v1397, %v1465
        %v1498 = vadd.f32 %v1398, %v1466
        %v1499 = vadd.f32 %v1399, %v1467
        %v1500 = vadd.f32 %v1400, %v1468
        %v1501 = vadd.f32 %v1401, %v1469
        %v1502 = vadd.f32 %v1402, %v1470
        %v1503 = vadd.f32 %v1403, %v1471
        %v1504 = vadd.f32 %v1404, %v1472
        %v1505 = vadd.f32 %v1405, %v1473
        %v1506 = vadd.f32 %v1406, %v1474
        %v1507 = vadd.f32 %v1407, %v1475
        %v1508 = vadd.f32 %v1408, %v1476
        %v1509 = vadd.f32 %v1409, %v1477
        %v1510 = vadd.f32 %v1410, %v1478
        %v1511 = vadd.f32 %v1411, %v1479
        %v1512 = vadd.f32 %v1412, %v1480
        %v1513 = vadd.f32 %v1413, %v1481
        %v1514 = vadd.f32 %v1414, %v1482
        %v1515 = vadd.f32 %v1415, %v1483
        %v1516 = vadd.f32 %v1416, %v1484
        %v1517 = vadd.f32 %v1417, %v1485
        %v1518 = vadd.f32 %v1418, %v1486
        %v1519 = vld [vmem:[%s1318 + $0x9] sm:$0xff]
        %v1520 = vld [vmem:[%s1318 + $0x11] sm:$0xff]
        %v1521 = vld [vmem:[%s1318 + $0x29] sm:$0xff]
        %v1522 = vld [vmem:[%s1318 + $0x31] sm:$0xff]
        %v1523 = vld [vmem:[%s1318 + $0x49] sm:$0xff]
        %v1524 = vld [vmem:[%s1318 + $0x51] sm:$0xff]
        %v1525 = vld [vmem:[%s1318 + $0x69] sm:$0xff]
        %v1526 = vld [vmem:[%s1318 + $0x71] sm:$0xff]
        %v1527 = vld [vmem:[%s1318 + $0x89] sm:$0xff]
        %v1528 = vld [vmem:[%s1318 + $0x91] sm:$0xff]
        %v1529 = vld [vmem:[%s1318 + $0xa9] sm:$0xff]
        %v1530 = vld [vmem:[%s1318 + $0xb1] sm:$0xff]
        %v1531 = vld [vmem:[%s1318 + $0xc9] sm:$0xff]
        %v1532 = vld [vmem:[%s1318 + $0xd1] sm:$0xff]
        %v1533 = vld [vmem:[%s1318 + $0xe9] sm:$0xff]
        %v1534 = vld [vmem:[%s1318 + $0xf1] sm:$0xff]
        %v1535 = vld [vmem:[%s1318 + $0x109] sm:$0xff]
        %v1536 = vld [vmem:[%s1318 + $0x111] sm:$0xff]
        %v1537 = vld [vmem:[%s1318 + $0x129] sm:$0xff]
        %v1538 = vld [vmem:[%s1318 + $0x131] sm:$0xff]
        %v1539 = vld [vmem:[%s1318 + $0x149] sm:$0xff]
        %v1540 = vld [vmem:[%s1318 + $0x151] sm:$0xff]
        %v1541 = vld [vmem:[%s1318 + $0x169] sm:$0xff]
        %v1542 = vld [vmem:[%s1318 + $0x171] sm:$0xff]
        %v1543 = vld [vmem:[%s1318 + $0x189] sm:$0xff]
        %v1544 = vld [vmem:[%s1318 + $0x191] sm:$0xff]
        %v1545 = vld [vmem:[%s1318 + $0x1a9] sm:$0xff]
        %v1546 = vld [vmem:[%s1318 + $0x1b1] sm:$0xff]
        %v1547 = vld [vmem:[%s1318 + $0x1c9] sm:$0xff]
        %v1548 = vld [vmem:[%s1318 + $0x1d1] sm:$0xff]
        %v1549 = vld [vmem:[%s1318 + $0x1e9] sm:$0xff]
        %v1550 = vld [vmem:[%s1318 + $0x1f1] sm:$0xff]
        %v1551 = vlaneseq
        %v1552 = vshrl.u32 %v1551, 7
        %v1553 = vsub.s32 0, %v1552
        %v1554 = vrot.slane %v717, %v1553
        %v1555 = vmul.f32 %v1519, %v1554
        %v1556 = vmul.f32 %v1520, %v1554
        %v1557 = vmul.f32 %v1521, %v1554
        %v1558 = vmul.f32 %v1522, %v1554
        %v1559 = vmul.f32 %v1523, %v1554
        %v1560 = vmul.f32 %v1524, %v1554
        %v1561 = vmul.f32 %v1525, %v1554
        %v1562 = vmul.f32 %v1526, %v1554
        %v1563 = vmul.f32 %v1527, %v1554
        %v1564 = vmul.f32 %v1528, %v1554
        %v1565 = vmul.f32 %v1529, %v1554
        %v1566 = vmul.f32 %v1530, %v1554
        %v1567 = vmul.f32 %v1531, %v1554
        %v1568 = vmul.f32 %v1532, %v1554
        %v1569 = vmul.f32 %v1533, %v1554
        %v1570 = vmul.f32 %v1534, %v1554
        %v1571 = vmul.f32 %v1535, %v1554
        %v1572 = vmul.f32 %v1536, %v1554
        %v1573 = vmul.f32 %v1537, %v1554
        %v1574 = vmul.f32 %v1538, %v1554
        %v1575 = vmul.f32 %v1539, %v1554
        %v1576 = vmul.f32 %v1540, %v1554
        %v1577 = vmul.f32 %v1541, %v1554
        %v1578 = vmul.f32 %v1542, %v1554
        %v1579 = vmul.f32 %v1543, %v1554
        %v1580 = vmul.f32 %v1544, %v1554
        %v1581 = vmul.f32 %v1545, %v1554
        %v1582 = vmul.f32 %v1546, %v1554
        %v1583 = vmul.f32 %v1547, %v1554
        %v1584 = vmul.f32 %v1548, %v1554
        %v1585 = vmul.f32 %v1549, %v1554
        %v1586 = vmul.f32 %v1550, %v1554
        %v1587 = vadd.f32 %v1487, %v1555
        %v1588 = vadd.f32 %v1488, %v1556
        %v1589 = vadd.f32 %v1489, %v1557
        %v1590 = vadd.f32 %v1490, %v1558
        %v1591 = vadd.f32 %v1491, %v1559
        %v1592 = vadd.f32 %v1492, %v1560
        %v1593 = vadd.f32 %v1493, %v1561
        %v1594 = vadd.f32 %v1494, %v1562
        %v1595 = vadd.f32 %v1495, %v1563
        %v1596 = vadd.f32 %v1496, %v1564
        %v1597 = vadd.f32 %v1497, %v1565
        %v1598 = vadd.f32 %v1498, %v1566
        %v1599 = vadd.f32 %v1499, %v1567
        %v1600 = vadd.f32 %v1500, %v1568
        %v1601 = vadd.f32 %v1501, %v1569
        %v1602 = vadd.f32 %v1502, %v1570
        %v1603 = vadd.f32 %v1503, %v1571
        %v1604 = vadd.f32 %v1504, %v1572
        %v1605 = vadd.f32 %v1505, %v1573
        %v1606 = vadd.f32 %v1506, %v1574
        %v1607 = vadd.f32 %v1507, %v1575
        %v1608 = vadd.f32 %v1508, %v1576
        %v1609 = vadd.f32 %v1509, %v1577
        %v1610 = vadd.f32 %v1510, %v1578
        %v1611 = vadd.f32 %v1511, %v1579
        %v1612 = vadd.f32 %v1512, %v1580
        %v1613 = vadd.f32 %v1513, %v1581
        %v1614 = vadd.f32 %v1514, %v1582
        %v1615 = vadd.f32 %v1515, %v1583
        %v1616 = vadd.f32 %v1516, %v1584
        %v1617 = vadd.f32 %v1517, %v1585
        %v1618 = vadd.f32 %v1518, %v1586
        %v1619 = vld [vmem:[%s4] sm:$0x1]
        %v1621 = vlaneseq
        %v1622 = vshrl.u32 %v1621, 7
        %v1623 = vsub.s32 0, %v1622
        %v1624 = vrot.slane %v1619, %v1623
        %v1626 = vadd.f32 %v1587, %v1624
        %v1627 = vadd.f32 %v1588, %v1624
        %v1628 = vadd.f32 %v1589, %v1624
        %v1629 = vadd.f32 %v1590, %v1624
        %v1630 = vadd.f32 %v1591, %v1624
        %v1631 = vadd.f32 %v1592, %v1624
        %v1632 = vadd.f32 %v1593, %v1624
        %v1633 = vadd.f32 %v1594, %v1624
        %v1634 = vadd.f32 %v1595, %v1624
        %v1635 = vadd.f32 %v1596, %v1624
        %v1636 = vadd.f32 %v1597, %v1624
        %v1637 = vadd.f32 %v1598, %v1624
        %v1638 = vadd.f32 %v1599, %v1624
        %v1639 = vadd.f32 %v1600, %v1624
        %v1640 = vadd.f32 %v1601, %v1624
        %v1641 = vadd.f32 %v1602, %v1624
        %v1642 = vadd.f32 %v1603, %v1624
        %v1643 = vadd.f32 %v1604, %v1624
        %v1644 = vadd.f32 %v1605, %v1624
        %v1645 = vadd.f32 %v1606, %v1624
        %v1646 = vadd.f32 %v1607, %v1624
        %v1647 = vadd.f32 %v1608, %v1624
        %v1648 = vadd.f32 %v1609, %v1624
        %v1649 = vadd.f32 %v1610, %v1624
        %v1650 = vadd.f32 %v1611, %v1624
        %v1651 = vadd.f32 %v1612, %v1624
        %v1652 = vadd.f32 %v1613, %v1624
        %v1653 = vadd.f32 %v1614, %v1624
        %v1654 = vadd.f32 %v1615, %v1624
        %v1655 = vadd.f32 %v1616, %v1624
        %v1656 = vadd.f32 %v1617, %v1624
        %v1657 = vadd.f32 %v1618, %v1624
        %v1658 = vmax.f32 %v1626, 0.0
        %v1659 = vmax.f32 %v1627, 0.0
        %v1660 = vmax.f32 %v1628, 0.0
        %v1661 = vmax.f32 %v1629, 0.0
        %v1662 = vmax.f32 %v1630, 0.0
        %v1663 = vmax.f32 %v1631, 0.0
        %v1664 = vmax.f32 %v1632, 0.0
        %v1665 = vmax.f32 %v1633, 0.0
        %v1666 = vmax.f32 %v1634, 0.0
        %v1667 = vmax.f32 %v1635, 0.0
        %v1668 = vmax.f32 %v1636, 0.0
        %v1669 = vmax.f32 %v1637, 0.0
        %v1670 = vmax.f32 %v1638, 0.0
        %v1671 = vmax.f32 %v1639, 0.0
        %v1672 = vmax.f32 %v1640, 0.0
        %v1673 = vmax.f32 %v1641, 0.0
        %v1674 = vmax.f32 %v1642, 0.0
        %v1675 = vmax.f32 %v1643, 0.0
        %v1676 = vmax.f32 %v1644, 0.0
        %v1677 = vmax.f32 %v1645, 0.0
        %v1678 = vmax.f32 %v1646, 0.0
        %v1679 = vmax.f32 %v1647, 0.0
        %v1680 = vmax.f32 %v1648, 0.0
        %v1681 = vmax.f32 %v1649, 0.0
        %v1682 = vmax.f32 %v1650, 0.0
        %v1683 = vmax.f32 %v1651, 0.0
        %v1684 = vmax.f32 %v1652, 0.0
        %v1685 = vmax.f32 %v1653, 0.0
        %v1686 = vmax.f32 %v1654, 0.0
        %v1687 = vmax.f32 %v1655, 0.0
        %v1688 = vmax.f32 %v1656, 0.0
        %v1689 = vmax.f32 %v1657, 0.0
        %v1690 = vmin.f32 %v1658, 6.0
        %v1691 = vmin.f32 %v1659, 6.0
        %v1692 = vmin.f32 %v1660, 6.0
        %v1693 = vmin.f32 %v1661, 6.0
        %v1694 = vmin.f32 %v1662, 6.0
        %v1695 = vmin.f32 %v1663, 6.0
        %v1696 = vmin.f32 %v1664, 6.0
        %v1697 = vmin.f32 %v1665, 6.0
        %v1698 = vmin.f32 %v1666, 6.0
        %v1699 = vmin.f32 %v1667, 6.0
        %v1700 = vmin.f32 %v1668, 6.0
        %v1701 = vmin.f32 %v1669, 6.0
        %v1702 = vmin.f32 %v1670, 6.0
        %v1703 = vmin.f32 %v1671, 6.0
        %v1704 = vmin.f32 %v1672, 6.0
        %v1705 = vmin.f32 %v1673, 6.0
        %v1706 = vmin.f32 %v1674, 6.0
        %v1707 = vmin.f32 %v1675, 6.0
        %v1708 = vmin.f32 %v1676, 6.0
        %v1709 = vmin.f32 %v1677, 6.0
        %v1710 = vmin.f32 %v1678, 6.0
        %v1711 = vmin.f32 %v1679, 6.0
        %v1712 = vmin.f32 %v1680, 6.0
        %v1713 = vmin.f32 %v1681, 6.0
        %v1714 = vmin.f32 %v1682, 6.0
        %v1715 = vmin.f32 %v1683, 6.0
        %v1716 = vmin.f32 %v1684, 6.0
        %v1717 = vmin.f32 %v1685, 6.0
        %v1718 = vmin.f32 %v1686, 6.0
        %v1719 = vmin.f32 %v1687, 6.0
        %v1720 = vmin.f32 %v1688, 6.0
        %v1721 = vmin.f32 %v1689, 6.0
        %v1722 = vpack.c.bf16 %v1691, %v1690
        %v1723 = vpack.c.bf16 %v1693, %v1692
        %v1724 = vpack.c.bf16 %v1695, %v1694
        %v1725 = vpack.c.bf16 %v1697, %v1696
        %v1726 = vpack.c.bf16 %v1699, %v1698
        %v1727 = vpack.c.bf16 %v1701, %v1700
        %v1728 = vpack.c.bf16 %v1703, %v1702
        %v1729 = vpack.c.bf16 %v1705, %v1704
        %v1730 = vpack.c.bf16 %v1707, %v1706
        %v1731 = vpack.c.bf16 %v1709, %v1708
        %v1732 = vpack.c.bf16 %v1711, %v1710
        %v1733 = vpack.c.bf16 %v1713, %v1712
        %v1734 = vpack.c.bf16 %v1715, %v1714
        %v1735 = vpack.c.bf16 %v1717, %v1716
        %v1736 = vpack.c.bf16 %v1719, %v1718
        %v1737 = vpack.c.bf16 %v1721, %v1720
        %v1738 = vld [vmem:[%s5] sm:$0xf]
        %v1739 = vld [vmem:[%s5 + $0x4] sm:$0xf]
        %v1740 = vld [vmem:[%s5 + $0x8] sm:$0xf]
        %v1741 = vld [vmem:[%s5 + $0xc] sm:$0xf]
        %v1742 = vld [vmem:[%s5 + $0x10] sm:$0xf]
        %v1743 = vld [vmem:[%s5 + $0x14] sm:$0xf]
        %v1744 = vld [vmem:[%s5 + $0x18] sm:$0xf]
        %v1745 = vld [vmem:[%s5 + $0x1c] sm:$0xf]
        %v1746 = vld [vmem:[%s5 + $0x20] sm:$0xf]
        %v1747 = vld [vmem:[%s5 + $0x24] sm:$0xf]
        %v1748 = vld [vmem:[%s5 + $0x28] sm:$0xf]
        %v1749 = vld [vmem:[%s5 + $0x2c] sm:$0xf]
        %v1750 = vld [vmem:[%s5 + $0x30] sm:$0xf]
        %v1751 = vld [vmem:[%s5 + $0x34] sm:$0xf]
        %v1752 = vld [vmem:[%s5 + $0x38] sm:$0xf]
        %v1753 = vld [vmem:[%s5 + $0x3c] sm:$0xf]
        %v1754 = vld [vmem:[%s6] sm:$0x1]
        %v1756 = vlaneseq
        %v1757 = vshrl.u32 %v1756, 7
        %v1758 = vsub.s32 0, %v1757
        %v1759 = vrot.slane %v1754, %v1758
        %v1777 = vunpack.c.l.b16 %v1738
        %v1778 = vunpack.c.l.b16 %v1739
        %v1779 = vunpack.c.l.b16 %v1740
        %v1780 = vunpack.c.l.b16 %v1741
        %v1781 = vunpack.c.l.b16 %v1742
        %v1782 = vunpack.c.l.b16 %v1743
        %v1783 = vunpack.c.l.b16 %v1744
        %v1784 = vunpack.c.l.b16 %v1745
        %v1785 = vunpack.c.l.b16 %v1746
        %v1786 = vunpack.c.l.b16 %v1747
        %v1787 = vunpack.c.l.b16 %v1748
        %v1788 = vunpack.c.l.b16 %v1749
        %v1789 = vunpack.c.l.b16 %v1750
        %v1790 = vunpack.c.l.b16 %v1751
        %v1791 = vunpack.c.l.b16 %v1752
        %v1792 = vunpack.c.l.b16 %v1753
        %v1793 = vpack.c.b16 %v1778, %v1777
        %v1794 = vpack.c.b16 %v1780, %v1779
        %v1795 = vpack.c.b16 %v1782, %v1781
        %v1796 = vpack.c.b16 %v1784, %v1783
        %v1797 = vpack.c.b16 %v1786, %v1785
        %v1798 = vpack.c.b16 %v1788, %v1787
        %v1799 = vpack.c.b16 %v1790, %v1789
        %v1800 = vpack.c.b16 %v1792, %v1791
        %1809 = vmatprep.subr.bf16.mxu0 0
        %1810 = vmatpush1.bf16.msra.mxu0 %v1793
        %1811 = vmatprep.subr.bf16.mxu0 0
        %1812 = vmatpush1.bf16.msra.mxu0 %v1794
        %1813 = vmatprep.subr.bf16.mxu0 0
        %1814 = vmatpush1.bf16.msra.mxu0 %v1795
        %1815 = vmatprep.subr.bf16.mxu0 0
        %1816 = vmatpush1.bf16.msra.mxu0 %v1796
        %1817 = vmatprep.subr.bf16.mxu0 0
        %1818 = vmatpush1.bf16.msra.mxu0 %v1797
        %1819 = vmatprep.subr.bf16.mxu0 0
        %1820 = vmatpush1.bf16.msra.mxu0 %v1798
        %1821 = vmatprep.subr.bf16.mxu0 0
        %1822 = vmatpush1.bf16.msra.mxu0 %v1799
        %1823 = vmatprep.subr.bf16.mxu0 0
        %1824 = vmatpush1.bf16.msra.mxu0 %v1800
        %1825 = vmatprep.subr.bf16.mxu0 0
        %1826 = vmatpush1.bf16.msra.mxu0 0
        %1827 = vmatprep.subr.bf16.mxu0 0
        %1828 = vmatpush1.bf16.msra.mxu0 0
        %1829 = vmatprep.subr.bf16.mxu0 0
        %1830 = vmatpush1.bf16.msra.mxu0 0
        %1831 = vmatprep.subr.bf16.mxu0 0
        %1832 = vmatpush1.bf16.msra.mxu0 0
        %1833 = vmatprep.subr.bf16.mxu0 0
        %1834 = vmatpush1.bf16.msra.mxu0 0
        %1835 = vmatprep.subr.bf16.mxu0 0
        %1836 = vmatpush1.bf16.msra.mxu0 0
        %1837 = vmatprep.subr.bf16.mxu0 0
        %1838 = vmatpush1.bf16.msra.mxu0 0
        %1839 = vmatprep.subr.bf16.mxu0 0
        %1840 = vmatpush1.bf16.msra.mxu0 0
        %1841 = vmatprep.mubr.bf16.mxu0 0
        %1842 = vmatmul.mubr.bf16.gmra.mrb[0].mxu0 %v1722
        %v1843 = vpop.f32.mrb[0].mxu0
        %v1844 = vadd.f32 %v1759, %v1843
        %v1845 = vpop.f32.mrb[0].mxu0
        %v1846 = vpop.f32.mrb[0].mxu0
        %v1847 = vadd.f32 %v1759, %v1846
        %v1848 = vpop.f32.mrb[0].mxu0
        %1849 = vmatprep.mubr.bf16.mxu0 0
        %1850 = vmatmul.mubr.bf16.gmra.mrb[0].mxu0 %v1723
        %v1851 = vpop.f32.mrb[0].mxu0
        %v1852 = vadd.f32 %v1759, %v1851
        %v1853 = vpop.f32.mrb[0].mxu0
        %v1854 = vpop.f32.mrb[0].mxu0
        %v1855 = vadd.f32 %v1759, %v1854
        %v1856 = vpop.f32.mrb[0].mxu0
        %1857 = vmatprep.mubr.bf16.mxu0 0
        %1858 = vmatmul.mubr.bf16.gmra.mrb[0].mxu0 %v1724
        %v1859 = vpop.f32.mrb[0].mxu0
        %v1860 = vadd.f32 %v1759, %v1859
        %v1861 = vpop.f32.mrb[0].mxu0
        %v1862 = vpop.f32.mrb[0].mxu0
        %v1863 = vadd.f32 %v1759, %v1862
        %v1864 = vpop.f32.mrb[0].mxu0
        %1865 = vmatprep.mubr.bf16.mxu0 0
        %1866 = vmatmul.mubr.bf16.gmra.mrb[0].mxu0 %v1725
        %v1867 = vpop.f32.mrb[0].mxu0
        %v1868 = vadd.f32 %v1759, %v1867
        %v1869 = vpop.f32.mrb[0].mxu0
        %v1870 = vpop.f32.mrb[0].mxu0
        %v1871 = vadd.f32 %v1759, %v1870
        %v1872 = vpop.f32.mrb[0].mxu0
        %1873 = vmatprep.mubr.bf16.mxu0 0
        %1874 = vmatmul.mubr.bf16.gmra.mrb[0].mxu0 %v1726
        %v1875 = vpop.f32.mrb[0].mxu0
        %v1876 = vadd.f32 %v1759, %v1875
        %v1877 = vpop.f32.mrb[0].mxu0
        %v1878 = vpop.f32.mrb[0].mxu0
        %v1879 = vadd.f32 %v1759, %v1878
        %v1880 = vpop.f32.mrb[0].mxu0
        %1881 = vmatprep.mubr.bf16.mxu0 0
        %1882 = vmatmul.mubr.bf16.gmra.mrb[0].mxu0 %v1727
        %v1883 = vpop.f32.mrb[0].mxu0
        %v1884 = vadd.f32 %v1759, %v1883
        %v1885 = vpop.f32.mrb[0].mxu0
        %v1886 = vpop.f32.mrb[0].mxu0
        %v1887 = vadd.f32 %v1759, %v1886
        %v1888 = vpop.f32.mrb[0].mxu0
        %1889 = vmatprep.mubr.bf16.mxu0 0
        %1890 = vmatmul.mubr.bf16.gmra.mrb[0].mxu0 %v1728
        %v1891 = vpop.f32.mrb[0].mxu0
        %v1892 = vadd.f32 %v1759, %v1891
        %v1893 = vpop.f32.mrb[0].mxu0
        %v1894 = vpop.f32.mrb[0].mxu0
        %v1895 = vadd.f32 %v1759, %v1894
        %v1896 = vpop.f32.mrb[0].mxu0
        %1897 = vmatprep.mubr.bf16.mxu0 0
        %1898 = vmatmul.mubr.bf16.gmra.mrb[0].mxu0 %v1729
        %v1899 = vpop.f32.mrb[0].mxu0
        %v1900 = vadd.f32 %v1759, %v1899
        %v1901 = vpop.f32.mrb[0].mxu0
        %v1902 = vpop.f32.mrb[0].mxu0
        %v1903 = vadd.f32 %v1759, %v1902
        %v1904 = vpop.f32.mrb[0].mxu0
        %1905 = vmatprep.mubr.bf16.mxu0 0
        %1906 = vmatmul.mubr.bf16.gmra.mrb[0].mxu0 %v1730
        %v1907 = vpop.f32.mrb[0].mxu0
        %v1908 = vadd.f32 %v1759, %v1907
        %v1909 = vpop.f32.mrb[0].mxu0
        %v1910 = vpop.f32.mrb[0].mxu0
        %v1911 = vadd.f32 %v1759, %v1910
        %v1912 = vpop.f32.mrb[0].mxu0
        %1913 = vmatprep.mubr.bf16.mxu0 0
        %1914 = vmatmul.mubr.bf16.gmra.mrb[0].mxu0 %v1731
        %v1915 = vpop.f32.mrb[0].mxu0
        %v1916 = vadd.f32 %v1759, %v1915
        %v1917 = vpop.f32.mrb[0].mxu0
        %v1918 = vpop.f32.mrb[0].mxu0
        %v1919 = vadd.f32 %v1759, %v1918
        %v1920 = vpop.f32.mrb[0].mxu0
        %1921 = vmatprep.mubr.bf16.mxu0 0
        %1922 = vmatmul.mubr.bf16.gmra.mrb[0].mxu0 %v1732
        %v1923 = vpop.f32.mrb[0].mxu0
        %v1924 = vadd.f32 %v1759, %v1923
        %v1925 = vpop.f32.mrb[0].mxu0
        %v1926 = vpop.f32.mrb[0].mxu0
        %v1927 = vadd.f32 %v1759, %v1926
        %v1928 = vpop.f32.mrb[0].mxu0
        %1929 = vmatprep.mubr.bf16.mxu0 0
        %1930 = vmatmul.mubr.bf16.gmra.mrb[0].mxu0 %v1733
        %v1931 = vpop.f32.mrb[0].mxu0
        %v1932 = vadd.f32 %v1759, %v1931
        %v1933 = vpop.f32.mrb[0].mxu0
        %v1934 = vpop.f32.mrb[0].mxu0
        %v1935 = vadd.f32 %v1759, %v1934
        %v1936 = vpop.f32.mrb[0].mxu0
        %1937 = vmatprep.mubr.bf16.mxu0 0
        %1938 = vmatmul.mubr.bf16.gmra.mrb[0].mxu0 %v1734
        %v1939 = vpop.f32.mrb[0].mxu0
        %v1940 = vadd.f32 %v1759, %v1939
        %v1941 = vpop.f32.mrb[0].mxu0
        %v1942 = vpop.f32.mrb[0].mxu0
        %v1943 = vadd.f32 %v1759, %v1942
        %v1944 = vpop.f32.mrb[0].mxu0
        %1945 = vmatprep.mubr.bf16.mxu0 0
        %1946 = vmatmul.mubr.bf16.gmra.mrb[0].mxu0 %v1735
        %v1947 = vpop.f32.mrb[0].mxu0
        %v1948 = vadd.f32 %v1759, %v1947
        %v1949 = vpop.f32.mrb[0].mxu0
        %v1950 = vpop.f32.mrb[0].mxu0
        %v1951 = vadd.f32 %v1759, %v1950
        %v1952 = vpop.f32.mrb[0].mxu0
        %1953 = vmatprep.mubr.bf16.mxu0 0
        %1954 = vmatmul.mubr.bf16.gmra.mrb[0].mxu0 %v1736
        %v1955 = vpop.f32.mrb[0].mxu0
        %v1956 = vadd.f32 %v1759, %v1955
        %v1957 = vpop.f32.mrb[0].mxu0
        %v1958 = vpop.f32.mrb[0].mxu0
        %v1959 = vadd.f32 %v1759, %v1958
        %v1960 = vpop.f32.mrb[0].mxu0
        %1961 = vmatprep.mubr.bf16.mxu0 0
        %1962 = vmatmul.mubr.bf16.gmra.mrb[0].mxu0 %v1737
        %v1963 = vpop.f32.mrb[0].mxu0
        %v1964 = vadd.f32 %v1759, %v1963
        %v1965 = vpop.f32.mrb[0].mxu0
        %v1966 = vpop.f32.mrb[0].mxu0
        %v1967 = vadd.f32 %v1759, %v1966
        %v1968 = vpop.f32.mrb[0].mxu0
        %1969 = vdwg.mxu0
        %v1970 = vadd.f32 %v1844, %v298
        %v1971 = vadd.f32 %v1847, %v299
        %v1972 = vadd.f32 %v1852, %v300
        %v1973 = vadd.f32 %v1855, %v301
        %v1974 = vadd.f32 %v1860, %v302
        %v1975 = vadd.f32 %v1863, %v303
        %v1976 = vadd.f32 %v1868, %v304
        %v1977 = vadd.f32 %v1871, %v305
        %v1978 = vadd.f32 %v1876, %v306
        %v1979 = vadd.f32 %v1879, %v307
        %v1980 = vadd.f32 %v1884, %v308
        %v1981 = vadd.f32 %v1887, %v309
        %v1982 = vadd.f32 %v1892, %v310
        %v1983 = vadd.f32 %v1895, %v311
        %v1984 = vadd.f32 %v1900, %v312
        %v1985 = vadd.f32 %v1903, %v313
        %v1986 = vadd.f32 %v1908, %v314
        %v1987 = vadd.f32 %v1911, %v315
        %v1988 = vadd.f32 %v1916, %v316
        %v1989 = vadd.f32 %v1919, %v317
        %v1990 = vadd.f32 %v1924, %v318
        %v1991 = vadd.f32 %v1927, %v319
        %v1992 = vadd.f32 %v1932, %v320
        %v1993 = vadd.f32 %v1935, %v321
        %v1994 = vadd.f32 %v1940, %v322
        %v1995 = vadd.f32 %v1943, %v323
        %v1996 = vadd.f32 %v1948, %v324
        %v1997 = vadd.f32 %v1951, %v325
        %v1998 = vadd.f32 %v1956, %v326
        %v1999 = vadd.f32 %v1959, %v327
        %v2000 = vadd.f32 %v1964, %v328
        %v2001 = vadd.f32 %v1967, %v329
        %2002 = vst.msk [vmem:[%s296] sm:$0xff] %vm369, %v1970
        %2003 = vst.msk [vmem:[%s296 + $0x8] sm:$0xff] %vm369, %v1971
        %2004 = vst.msk [vmem:[%s296 + $0x10] sm:$0xff] %vm369, %v1972
        %2005 = vst.msk [vmem:[%s296 + $0x18] sm:$0xff] %vm369, %v1973
        %2006 = vst.msk [vmem:[%s296 + $0x20] sm:$0xff] %vm369, %v1974
        %2007 = vst.msk [vmem:[%s296 + $0x28] sm:$0xff] %vm369, %v1975
        %2008 = vst.msk [vmem:[%s296 + $0x30] sm:$0xff] %vm369, %v1976
        %2009 = vst.msk [vmem:[%s296 + $0x38] sm:$0xff] %vm369, %v1977
        %2010 = vst.msk [vmem:[%s296 + $0x40] sm:$0xff] %vm369, %v1978
        %2011 = vst.msk [vmem:[%s296 + $0x48] sm:$0xff] %vm369, %v1979
        %2012 = vst.msk [vmem:[%s296 + $0x50] sm:$0xff] %vm369, %v1980
        %2013 = vst.msk [vmem:[%s296 + $0x58] sm:$0xff] %vm369, %v1981
        %2014 = vst.msk [vmem:[%s296 + $0x60] sm:$0xff] %vm369, %v1982
        %2015 = vst.msk [vmem:[%s296 + $0x68] sm:$0xff] %vm369, %v1983
        %2016 = vst.msk [vmem:[%s296 + $0x70] sm:$0xff] %vm369, %v1984
        %2017 = vst.msk [vmem:[%s296 + $0x78] sm:$0xff] %vm369, %v1985
        %2018 = vst.msk [vmem:[%s296 + $0x80] sm:$0xff] %vm369, %v1986
        %2019 = vst.msk [vmem:[%s296 + $0x88] sm:$0xff] %vm369, %v1987
        %2020 = vst.msk [vmem:[%s296 + $0x90] sm:$0xff] %vm369, %v1988
        %2021 = vst.msk [vmem:[%s296 + $0x98] sm:$0xff] %vm369, %v1989
        %2022 = vst.msk [vmem:[%s296 + $0xa0] sm:$0xff] %vm369, %v1990
        %2023 = vst.msk [vmem:[%s296 + $0xa8] sm:$0xff] %vm369, %v1991
        %2024 = vst.msk [vmem:[%s296 + $0xb0] sm:$0xff] %vm369, %v1992
        %2025 = vst.msk [vmem:[%s296 + $0xb8] sm:$0xff] %vm369, %v1993
        %2026 = vst.msk [vmem:[%s296 + $0xc0] sm:$0xff] %vm369, %v1994
        %2027 = vst.msk [vmem:[%s296 + $0xc8] sm:$0xff] %vm369, %v1995
        %2028 = vst.msk [vmem:[%s296 + $0xd0] sm:$0xff] %vm369, %v1996
        %2029 = vst.msk [vmem:[%s296 + $0xd8] sm:$0xff] %vm369, %v1997
        %2030 = vst.msk [vmem:[%s296 + $0xe0] sm:$0xff] %vm369, %v1998
        %2031 = vst.msk [vmem:[%s296 + $0xe8] sm:$0xff] %vm369, %v1999
        %2032 = vst.msk [vmem:[%s296 + $0xf0] sm:$0xff] %vm369, %v2000
        %2033 = vst.msk [vmem:[%s296 + $0xf8] sm:$0xff] %vm369, %v2001
        %s2034 = sand.u32 %s184, 1
        %s2035 = scalar_lea.sflag [#allocation5], %s2034
        %s2036 = sand.u32 %s184, 1
        %s2037 = smul.addr %s2036, 256
        %s2038 = scalar_lea.vmem [#allocation6], %s2037
        // Predicated region
        $region53: #{tpu_custom_call.1} parent=47 // pred_check
          %p2039 = pneg %p194
        $region54: #{tpu_custom_call.1} parent=47 // pred_check_branch
          %2041 = sbr.rel (%p2039) target = $region56
        $region55: #{tpu_custom_call.1} parent=47 // pred_region
          %s2043 = ssub.s32 4096, 4096
          %2044 = vsyncadd %s2035, %s2043
          %s2045 = smul.addr %s24, 32
          %s2046 = smul.addr %s2045, 128
          %s2047 = scalar_lea.hbm %s7, %s2046
          %s2048 = sshll.u32 %s2038, 4
          %s2049 = int_to_ptr.vmem [resolvable:$true] %s2048
          %2054 = dma.vmem_to_hbm [thread:$0]  %s2049, 4096, %s2047, %s2035, 128, 128, 8
        $region56: #{tpu_custom_call.1} parent=47 // pred_fallthru
          _
      $region48: #{tpu_custom_call.1} parent=5 // pred_fallthru
        _
      %p2055 = scmp.le.s32.totalorder 2, %s19
      // Predicated region
      $region57: #{tpu_custom_call.1} parent=5 // pred_check
        %p2056 = pneg %p2055
      $region58: #{tpu_custom_call.1} parent=5 // pred_check_branch
        %2058 = sbr.rel (%p2056) target = $region60
      $region59: #{tpu_custom_call.1} parent=5 // pred_region
        %s2059 = ssub.s32 %s19, 2
        // Predicated region
        $region61: #{tpu_custom_call.1} parent=59 // pred_check
          %p2060 = pneg %p200
        $region62: #{tpu_custom_call.1} parent=59 // pred_check_branch
          %2062 = sbr.rel (%p2060) target = $region64
        $region63: #{tpu_custom_call.1} parent=59 // pred_region
          %s2063 = sand.u32 %s185, 1
          %s2064 = scalar_lea.sflag [#allocation5], %s2063
          %s2065 = sand.u32 %s185, 1
          %s2066 = smul.addr %s2065, 256
          %s2067 = scalar_lea.vmem [#allocation6], %s2066
          %2068 = dma.done %s2064, 4096
        $region64: #{tpu_custom_call.1} parent=59 // pred_fallthru
          _
      $region60: #{tpu_custom_call.1} parent=5 // pred_fallthru
        _
    $region6: #{tpu_custom_call.1} parent=1 // loop_footer
      %s23 = sadd.s32 1, %s19
    $region7: #{tpu_custom_call.1} parent=1 // loop_footer_branch
      %18 = sbr.rel target = $region3
    $region8: #{tpu_custom_call.1} parent=1 // loop_exit
      _
    %2069 = vsyncpa [#allocation4], 1
    %s2070 = scalar_lea.sflag [#allocation4], 1
    %2071 = vsyncpa %s2070, 1
    %2072 = vsyncpa [#allocation5], 1
    %s2073 = scalar_lea.sflag [#allocation5], 1
    %2074 = vsyncpa %s2073, 1

</llo_original>
